<compile_context>
chip_gen: v7x
topology: tpu7x:2x2x1
jax: 0.10.0
libtpu: 0.0.40
codegen_flags: <defaults>
</compile_context>

<pallas_src>
import math

import jax
import jax.numpy as jnp
from jax.experimental import pallas as pl
from jax.experimental.pallas import tpu as pltpu

# ---- model config (small, consistent with the module) ----
B = 2          # batch
T = 8          # sequence length
C = 32         # n_embd
N_HEAD = 4     # n_head
HD = C // N_HEAD

NEG_INF = -1e30   # finite: diagonal is always attendable, so no NaN rows possible


def _attn_kernel(x_ref, wqkv_ref, bqkv_ref, wp_ref, bp_ref, o_ref):
    """One batch element per grid step: fused QKV + masked MHA + fused out-proj.

    x_ref    : (T, C)    activations for this batch element
    wqkv_ref : (C, 3C)   packed [Wq | Wk | Wv]
    bqkv_ref : (1, 3C)   packed [bq | bk | bv]
    wp_ref   : (C, C), bp_ref: (1, C)   output projection
    o_ref    : (T, C)    output for this batch element
    """
    Tk, Ck = x_ref.shape
    x = x_ref[...]                                   # (T, C)

    # Single fused MXU matmul for Q, K and V.
    # NOTE: at realistic dims (C >= 128) cast both operands to bf16 here (keep
    # preferred_element_type=f32 accumulation); at C=32 the f32 path is fine.
    qkv = jnp.dot(x, wqkv_ref[...],
                  preferred_element_type=jnp.float32) + bqkv_ref[...]   # (T, 3C)

    # Causal additive bias generated in-kernel (iota/compare/select on the VPU)
    # instead of shipping an O(T^2) mask array through HBM.
    rows = jax.lax.broadcasted_iota(jnp.int32, (Tk, Tk), 0)
    cols = jax.lax.broadcasted_iota(jnp.int32, (Tk, Tk), 1)
    bias = jnp.where(rows >= cols, 0.0, NEG_INF).astype(jnp.float32)

    scale = 1.0 / math.sqrt(HD)

    # Static head loop (N_HEAD = 4). The output projection is fused into the loop:
    #   concat_h(y_h) @ Wp == sum_h  y_h @ Wp[h*HD:(h+1)*HD, :]
    # so there is no per-head scratch slab, no masked partial stores and no
    # VMEM store->load round trip.
    # NOTE: at realistic sizes keep HD >= 128 on the lane axis (or put the head
    # axis on sublanes) so these per-head slices are not 8-wide lane extracts.
    acc = jnp.zeros((Tk, Ck), jnp.float32)
    for h in range(N_HEAD):
        qh = qkv[:, h * HD:(h + 1) * HD]                   # (T, HD)
        kh = qkv[:, C + h * HD:C + (h + 1) * HD]           # (T, HD)
        vh = qkv[:, 2 * C + h * HD:2 * C + (h + 1) * HD]   # (T, HD)

        s = jnp.dot(qh, kh.T, preferred_element_type=jnp.float32) * scale + bias

        # numerically-stable softmax with exact normalization
        m = jnp.max(s, axis=-1, keepdims=True)
        p = jnp.exp(s - m)
        attn = p / jnp.sum(p, axis=-1, keepdims=True)

        # TODO(synk): attn_drop / resid_drop are identity (eval mode / pdrop=0)

        yh = jnp.dot(attn, vh, preferred_element_type=jnp.float32)     # (T, HD)
        acc = acc + jnp.dot(yh, wp_ref[h * HD:(h + 1) * HD, :],
                            preferred_element_type=jnp.float32)        # (T, C)

    # NOTE: at real C >= 128 this store is already lane-dense; at C=32 an
    # in-kernel relayout to a (T*C/128, 128) slab would cost more than the
    # masked store it saves.
    o_ref[...] = (acc + bp_ref[...]).astype(o_ref.dtype)


def pack_qkv(wq, wk, wv, bq, bk, bv):
    """Pack QKV weights/biases ONCE, outside the per-call path."""
    return jnp.concatenate([wq, wk, wv], axis=1), jnp.concatenate([bq, bk, bv], axis=1)


def causal_self_attention(x, wqkv, bqkv, wp, bp):
    """x: (B, T, C) float32. wqkv: (C, 3C), bqkv: (1, 3C), wp: (C, C), bp: (1, C)."""
    Bx, Tx, Cx = x.shape

    flops = (2 * Bx * Tx * Cx * 3 * Cx            # fused QKV projection
             + 2 * Bx * N_HEAD * Tx * Tx * HD     # q @ k^T
             + 2 * Bx * N_HEAD * Tx * Tx * HD     # attn @ v
             + 2 * Bx * Tx * Cx * Cx)             # output projection
    bytes_accessed = 4 * (2 * Bx * Tx * Cx + Cx * 3 * Cx + 3 * Cx + Cx * Cx + Cx)

    grid_spec = pltpu.PrefetchScalarGridSpec(
        num_scalar_prefetch=0,
        grid=(Bx,),   # batch axis is 'parallel' -> shards across the 2 TCs on v7x
        in_specs=[
            pl.BlockSpec((None, Tx, Cx), lambda b: (b, 0, 0)),     # x, per-batch tile
            pl.BlockSpec((Cx, 3 * Cx), lambda b: (0, 0)),          # wqkv (fetched once)
            pl.BlockSpec((1, 3 * Cx), lambda b: (0, 0)),           # bqkv
            pl.BlockSpec((Cx, Cx), lambda b: (0, 0)),              # wp
            pl.BlockSpec((1, Cx), lambda b: (0, 0)),               # bp
        ],
        out_specs=pl.BlockSpec((None, Tx, Cx), lambda b: (b, 0, 0)),
    )
    # TODO(synk): at realistic dims replace this per-batch grid with a flash-attention
    # layout: grid=(batch, head, q_tile, kv_tile), bf16 operands, f32 accumulator +
    # m/l scratch with pl.when init/finalize on the kv axis.
    return pl.pallas_call(
        _attn_kernel,
        out_shape=jax.ShapeDtypeStruct((Bx, Tx, Cx), x.dtype),
        grid_spec=grid_spec,
        compiler_params=pltpu.CompilerParams(dimension_semantics=("parallel",)),
        cost_estimate=pl.CostEstimate(flops=flops,
                                      transcendentals=Bx * N_HEAD * Tx * Tx,
                                      bytes_accessed=bytes_accessed),
    )(x, wqkv, bqkv, wp, bp)


def _reference(x, wq, wk, wv, wp, bq, bk, bv, bp):
    """Pure-JAX reference mirroring the PyTorch forward (eval mode)."""
    Bx, Tx, Cx = x.shape
    q = (x @ wq + bq).reshape(Bx, Tx, N_HEAD, HD).transpose(0, 2, 1, 3)
    k = (x @ wk + bk).reshape(Bx, Tx, N_HEAD, HD).transpose(0, 2, 1, 3)
    v = (x @ wv + bv).reshape(Bx, Tx, N_HEAD, HD).transpose(0, 2, 1, 3)
    att = jnp.einsum("bhqd,bhkd->bhqk", q, k) * (1.0 / math.sqrt(HD))
    mask = jnp.tril(jnp.ones((Tx, Tx), bool))
    att = jnp.where(mask, att, -jnp.inf)
    att = jax.nn.softmax(att, axis=-1)
    y = jnp.einsum("bhqk,bhkd->bhqd", att, v)
    y = y.transpose(0, 2, 1, 3).reshape(Bx, Tx, Cx)
    return y @ wp + bp


if __name__ == "__main__":
    key = jax.random.PRNGKey(0)
    keys = jax.random.split(key, 9)

    x = jax.random.normal(keys[0], (B, T, C), jnp.float32)

    # deterministic parameter init (synthetic; matches nn.Linear shapes C->C)
    std = 0.02
    wq = std * jax.random.normal(keys[1], (C, C), jnp.float32)
    wk = std * jax.random.normal(keys[2], (C, C), jnp.float32)
    wv = std * jax.random.normal(keys[3], (C, C), jnp.float32)
    wp = std * jax.random.normal(keys[4], (C, C), jnp.float32)
    bq = std * jax.random.normal(keys[5], (1, C), jnp.float32)
    bk = std * jax.random.normal(keys[6], (1, C), jnp.float32)
    bv = std * jax.random.normal(keys[7], (1, C), jnp.float32)
    bp = std * jax.random.normal(keys[8], (1, C), jnp.float32)

    # pack QKV once, outside the per-forward path
    wqkv, bqkv = pack_qkv(wq, wk, wv, bq, bk, bv)

    out = causal_self_attention(x, wqkv, bqkv, wp, bp)
    out = jax.block_until_ready(out)

    ref = _reference(x, wq, wk, wv, wp, bq, bk, bv, bp)
    assert out.shape == (B, T, C)
    assert jnp.allclose(out, ref, atol=2e-4, rtol=2e-4), "mismatch vs reference"

    print("KERNEL_OK")
</pallas_src>

<mosaic_0001>
module attributes {stable_mosaic.version = 11 : i64} {
  func.func @_attn_kernel(%arg0: i32, %arg1: memref<1x8x32xf32, #tpu.memory_space<vmem>>, %arg2: memref<32x96xf32, #tpu.memory_space<vmem>>, %arg3: memref<1x96xf32, #tpu.memory_space<vmem>>, %arg4: memref<32x32xf32, #tpu.memory_space<vmem>>, %arg5: memref<1x32xf32, #tpu.memory_space<vmem>>, %arg6: memref<1x8x32xf32, #tpu.memory_space<vmem>>) attributes {dimension_semantics = [#tpu.dimension_semantics<parallel>], iteration_bounds = array<i64: 2>, scalar_prefetch = 0 : i64, scratch_operands = 0 : i64, tpu.core_type = #tpu.core_type<tc>, window_params = [{transform_indices = @transform_0, window_bounds = array<i64: 1, 8, 32>}, {pipeline_mode = #tpu.pipeline_mode<synchronous>, transform_indices = @transform_1, window_bounds = array<i64: 32, 96>}, {pipeline_mode = #tpu.pipeline_mode<synchronous>, transform_indices = @transform_2, window_bounds = array<i64: 1, 96>}, {pipeline_mode = #tpu.pipeline_mode<synchronous>, transform_indices = @transform_3, window_bounds = array<i64: 32, 32>}, {pipeline_mode = #tpu.pipeline_mode<synchronous>, transform_indices = @transform_4, window_bounds = array<i64: 1, 32>}, {transform_indices = @transform_5, window_bounds = array<i64: 1, 8, 32>}]} {
    %c0 = arith.constant 0 : index
    %c0_0 = arith.constant 0 : index
    %c0_1 = arith.constant 0 : index
    %0 = vector.load %arg1[%c0, %c0_0, %c0_1] : memref<1x8x32xf32, #tpu.memory_space<vmem>>, vector<1x8x32xf32>
    %1 = vector.shape_cast %0 : vector<1x8x32xf32> to vector<8x32xf32>
    %c0_2 = arith.constant 0 : index
    %c0_3 = arith.constant 0 : index
    %2 = vector.load %arg2[%c0_2, %c0_3] : memref<32x96xf32, #tpu.memory_space<vmem>>, vector<32x96xf32>
    %cst = arith.constant dense<0.000000e+00> : vector<8x96xf32>
    %3 = tpu.matmul %1, %2, %cst {dimension_numbers = #tpu.dot_dimension_numbers<[1], [0], [0], [1], [0, 0, 1, 1], [], []>} : vector<8x32xf32>, vector<32x96xf32>, vector<8x96xf32> -> vector<8x96xf32>
    %c0_4 = arith.constant 0 : index
    %c0_5 = arith.constant 0 : index
    %4 = vector.load %arg3[%c0_4, %c0_5] : memref<1x96xf32, #tpu.memory_space<vmem>>, vector<1x96xf32>
    %5 = vector.broadcast %4 : vector<1x96xf32> to vector<8x96xf32>
    %6 = arith.addf %3, %5 : vector<8x96xf32>
    %7 = tpu.iota {dimensions = array<i32: 0>} : vector<8x8xi32>
    %8 = tpu.iota {dimensions = array<i32: 1>} : vector<8x8xi32>
    %9 = arith.cmpi sge, %7, %8 : vector<8x8xi32>
    %cst_6 = arith.constant 0.000000e+00 : f32
    %cst_7 = arith.constant -1.000000e+30 : f32
    %10 = vector.broadcast %cst_6 : f32 to vector<8x8xf32>
    %11 = vector.broadcast %cst_7 : f32 to vector<8x8xf32>
    %12 = arith.select %9, %10, %11 : vector<8x8xi1>, vector<8x8xf32>
    %cst_8 = arith.constant 0.000000e+00 : f32
    %13 = vector.broadcast %cst_8 : f32 to vector<8x32xf32>
    %14 = vector.extract_strided_slice %6 {offsets = [0, 0], sizes = [8, 8], strides = [1, 1]} : vector<8x96xf32> to vector<8x8xf32>
    %15 = vector.extract_strided_slice %6 {offsets = [0, 32], sizes = [8, 8], strides = [1, 1]} : vector<8x96xf32> to vector<8x8xf32>
    %16 = vector.extract_strided_slice %6 {offsets = [0, 64], sizes = [8, 8], strides = [1, 1]} : vector<8x96xf32> to vector<8x8xf32>
    %17 = tpu.transpose %15, [1, 0] : vector<8x8xf32> -> vector<8x8xf32>
    %cst_9 = arith.constant dense<0.000000e+00> : vector<8x8xf32>
    %18 = tpu.matmul %14, %17, %cst_9 {dimension_numbers = #tpu.dot_dimension_numbers<[1], [0], [0], [1], [0, 0, 1, 1], [], []>} : vector<8x8xf32>, vector<8x8xf32>, vector<8x8xf32> -> vector<8x8xf32>
    %cst_10 = arith.constant 0.353553385 : f32
    %19 = vector.broadcast %cst_10 : f32 to vector<8x8xf32>
    %20 = arith.mulf %18, %19 : vector<8x8xf32>
    %21 = arith.addf %20, %12 : vector<8x8xf32>
    %cst_11 = arith.constant dense<0xFF800000> : vector<8xf32>
    %22 = vector.multi_reduction <maximumf>, %21, %cst_11 [1] : vector<8x8xf32> to vector<8xf32>
    %23 = vector.shape_cast %22 : vector<8xf32> to vector<8x1xf32>
    %24 = vector.broadcast %23 : vector<8x1xf32> to vector<8x8xf32>
    %25 = arith.subf %21, %24 : vector<8x8xf32>
    %26 = math.exp %25 : vector<8x8xf32>
    %cst_12 = arith.constant dense<0.000000e+00> : vector<8xf32>
    %27 = vector.multi_reduction <add>, %26, %cst_12 [1] : vector<8x8xf32> to vector<8xf32>
    %28 = vector.shape_cast %27 : vector<8xf32> to vector<8x1xf32>
    %29 = vector.broadcast %28 : vector<8x1xf32> to vector<8x8xf32>
    %30 = arith.divf %26, %29 : vector<8x8xf32>
    %cst_13 = arith.constant dense<0.000000e+00> : vector<8x8xf32>
    %31 = tpu.matmul %30, %16, %cst_13 {dimension_numbers = #tpu.dot_dimension_numbers<[1], [0], [0], [1], [0, 0, 1, 1], [], []>} : vector<8x8xf32>, vector<8x8xf32>, vector<8x8xf32> -> vector<8x8xf32>
    %c0_14 = arith.constant 0 : index
    %c0_15 = arith.constant 0 : index
    %32 = vector.load %arg4[%c0_14, %c0_15] : memref<32x32xf32, #tpu.memory_space<vmem>>, vector<8x32xf32>
    %cst_16 = arith.constant dense<0.000000e+00> : vector<8x32xf32>
    %33 = tpu.matmul %31, %32, %cst_16 {dimension_numbers = #tpu.dot_dimension_numbers<[1], [0], [0], [1], [0, 0, 1, 1], [], []>} : vector<8x8xf32>, vector<8x32xf32>, vector<8x32xf32> -> vector<8x32xf32>
    %34 = arith.addf %13, %33 : vector<8x32xf32>
    %35 = vector.extract_strided_slice %6 {offsets = [0, 8], sizes = [8, 8], strides = [1, 1]} : vector<8x96xf32> to vector<8x8xf32>
    %36 = vector.extract_strided_slice %6 {offsets = [0, 40], sizes = [8, 8], strides = [1, 1]} : vector<8x96xf32> to vector<8x8xf32>
    %37 = vector.extract_strided_slice %6 {offsets = [0, 72], sizes = [8, 8], strides = [1, 1]} : vector<8x96xf32> to vector<8x8xf32>
    %38 = tpu.transpose %36, [1, 0] : vector<8x8xf32> -> vector<8x8xf32>
    %cst_17 = arith.constant dense<0.000000e+00> : vector<8x8xf32>
    %39 = tpu.matmul %35, %38, %cst_17 {dimension_numbers = #tpu.dot_dimension_numbers<[1], [0], [0], [1], [0, 0, 1, 1], [], []>} : vector<8x8xf32>, vector<8x8xf32>, vector<8x8xf32> -> vector<8x8xf32>
    %cst_18 = arith.constant 0.353553385 : f32
    %40 = vector.broadcast %cst_18 : f32 to vector<8x8xf32>
    %41 = arith.mulf %39, %40 : vector<8x8xf32>
    %42 = arith.addf %41, %12 : vector<8x8xf32>
    %cst_19 = arith.constant dense<0xFF800000> : vector<8xf32>
    %43 = vector.multi_reduction <maximumf>, %42, %cst_19 [1] : vector<8x8xf32> to vector<8xf32>
    %44 = vector.shape_cast %43 : vector<8xf32> to vector<8x1xf32>
    %45 = vector.broadcast %44 : vector<8x1xf32> to vector<8x8xf32>
    %46 = arith.subf %42, %45 : vector<8x8xf32>
    %47 = math.exp %46 : vector<8x8xf32>
    %cst_20 = arith.constant dense<0.000000e+00> : vector<8xf32>
    %48 = vector.multi_reduction <add>, %47, %cst_20 [1] : vector<8x8xf32> to vector<8xf32>
    %49 = vector.shape_cast %48 : vector<8xf32> to vector<8x1xf32>
    %50 = vector.broadcast %49 : vector<8x1xf32> to vector<8x8xf32>
    %51 = arith.divf %47, %50 : vector<8x8xf32>
    %cst_21 = arith.constant dense<0.000000e+00> : vector<8x8xf32>
    %52 = tpu.matmul %51, %37, %cst_21 {dimension_numbers = #tpu.dot_dimension_numbers<[1], [0], [0], [1], [0, 0, 1, 1], [], []>} : vector<8x8xf32>, vector<8x8xf32>, vector<8x8xf32> -> vector<8x8xf32>
    %c8 = arith.constant 8 : index
    %c0_22 = arith.constant 0 : index
    %53 = vector.load %arg4[%c8, %c0_22] : memref<32x32xf32, #tpu.memory_space<vmem>>, vector<8x32xf32>
    %cst_23 = arith.constant dense<0.000000e+00> : vector<8x32xf32>
    %54 = tpu.matmul %52, %53, %cst_23 {dimension_numbers = #tpu.dot_dimension_numbers<[1], [0], [0], [1], [0, 0, 1, 1], [], []>} : vector<8x8xf32>, vector<8x32xf32>, vector<8x32xf32> -> vector<8x32xf32>
    %55 = arith.addf %34, %54 : vector<8x32xf32>
    %56 = vector.extract_strided_slice %6 {offsets = [0, 16], sizes = [8, 8], strides = [1, 1]} : vector<8x96xf32> to vector<8x8xf32>
    %57 = vector.extract_strided_slice %6 {offsets = [0, 48], sizes = [8, 8], strides = [1, 1]} : vector<8x96xf32> to vector<8x8xf32>
    %58 = vector.extract_strided_slice %6 {offsets = [0, 80], sizes = [8, 8], strides = [1, 1]} : vector<8x96xf32> to vector<8x8xf32>
    %59 = tpu.transpose %57, [1, 0] : vector<8x8xf32> -> vector<8x8xf32>
    %cst_24 = arith.constant dense<0.000000e+00> : vector<8x8xf32>
    %60 = tpu.matmul %56, %59, %cst_24 {dimension_numbers = #tpu.dot_dimension_numbers<[1], [0], [0], [1], [0, 0, 1, 1], [], []>} : vector<8x8xf32>, vector<8x8xf32>, vector<8x8xf32> -> vector<8x8xf32>
    %cst_25 = arith.constant 0.353553385 : f32
    %61 = vector.broadcast %cst_25 : f32 to vector<8x8xf32>
    %62 = arith.mulf %60, %61 : vector<8x8xf32>
    %63 = arith.addf %62, %12 : vector<8x8xf32>
    %cst_26 = arith.constant dense<0xFF800000> : vector<8xf32>
    %64 = vector.multi_reduction <maximumf>, %63, %cst_26 [1] : vector<8x8xf32> to vector<8xf32>
    %65 = vector.shape_cast %64 : vector<8xf32> to vector<8x1xf32>
    %66 = vector.broadcast %65 : vector<8x1xf32> to vector<8x8xf32>
    %67 = arith.subf %63, %66 : vector<8x8xf32>
    %68 = math.exp %67 : vector<8x8xf32>
    %cst_27 = arith.constant dense<0.000000e+00> : vector<8xf32>
    %69 = vector.multi_reduction <add>, %68, %cst_27 [1] : vector<8x8xf32> to vector<8xf32>
    %70 = vector.shape_cast %69 : vector<8xf32> to vector<8x1xf32>
    %71 = vector.broadcast %70 : vector<8x1xf32> to vector<8x8xf32>
    %72 = arith.divf %68, %71 : vector<8x8xf32>
    %cst_28 = arith.constant dense<0.000000e+00> : vector<8x8xf32>
    %73 = tpu.matmul %72, %58, %cst_28 {dimension_numbers = #tpu.dot_dimension_numbers<[1], [0], [0], [1], [0, 0, 1, 1], [], []>} : vector<8x8xf32>, vector<8x8xf32>, vector<8x8xf32> -> vector<8x8xf32>
    %c16 = arith.constant 16 : index
    %c0_29 = arith.constant 0 : index
    %74 = vector.load %arg4[%c16, %c0_29] : memref<32x32xf32, #tpu.memory_space<vmem>>, vector<8x32xf32>
    %cst_30 = arith.constant dense<0.000000e+00> : vector<8x32xf32>
    %75 = tpu.matmul %73, %74, %cst_30 {dimension_numbers = #tpu.dot_dimension_numbers<[1], [0], [0], [1], [0, 0, 1, 1], [], []>} : vector<8x8xf32>, vector<8x32xf32>, vector<8x32xf32> -> vector<8x32xf32>
    %76 = arith.addf %55, %75 : vector<8x32xf32>
    %77 = vector.extract_strided_slice %6 {offsets = [0, 24], sizes = [8, 8], strides = [1, 1]} : vector<8x96xf32> to vector<8x8xf32>
    %78 = vector.extract_strided_slice %6 {offsets = [0, 56], sizes = [8, 8], strides = [1, 1]} : vector<8x96xf32> to vector<8x8xf32>
    %79 = vector.extract_strided_slice %6 {offsets = [0, 88], sizes = [8, 8], strides = [1, 1]} : vector<8x96xf32> to vector<8x8xf32>
    %80 = tpu.transpose %78, [1, 0] : vector<8x8xf32> -> vector<8x8xf32>
    %cst_31 = arith.constant dense<0.000000e+00> : vector<8x8xf32>
    %81 = tpu.matmul %77, %80, %cst_31 {dimension_numbers = #tpu.dot_dimension_numbers<[1], [0], [0], [1], [0, 0, 1, 1], [], []>} : vector<8x8xf32>, vector<8x8xf32>, vector<8x8xf32> -> vector<8x8xf32>
    %cst_32 = arith.constant 0.353553385 : f32
    %82 = vector.broadcast %cst_32 : f32 to vector<8x8xf32>
    %83 = arith.mulf %81, %82 : vector<8x8xf32>
    %84 = arith.addf %83, %12 : vector<8x8xf32>
    %cst_33 = arith.constant dense<0xFF800000> : vector<8xf32>
    %85 = vector.multi_reduction <maximumf>, %84, %cst_33 [1] : vector<8x8xf32> to vector<8xf32>
    %86 = vector.shape_cast %85 : vector<8xf32> to vector<8x1xf32>
    %87 = vector.broadcast %86 : vector<8x1xf32> to vector<8x8xf32>
    %88 = arith.subf %84, %87 : vector<8x8xf32>
    %89 = math.exp %88 : vector<8x8xf32>
    %cst_34 = arith.constant dense<0.000000e+00> : vector<8xf32>
    %90 = vector.multi_reduction <add>, %89, %cst_34 [1] : vector<8x8xf32> to vector<8xf32>
    %91 = vector.shape_cast %90 : vector<8xf32> to vector<8x1xf32>
    %92 = vector.broadcast %91 : vector<8x1xf32> to vector<8x8xf32>
    %93 = arith.divf %89, %92 : vector<8x8xf32>
    %cst_35 = arith.constant dense<0.000000e+00> : vector<8x8xf32>
    %94 = tpu.matmul %93, %79, %cst_35 {dimension_numbers = #tpu.dot_dimension_numbers<[1], [0], [0], [1], [0, 0, 1, 1], [], []>} : vector<8x8xf32>, vector<8x8xf32>, vector<8x8xf32> -> vector<8x8xf32>
    %c24 = arith.constant 24 : index
    %c0_36 = arith.constant 0 : index
    %95 = vector.load %arg4[%c24, %c0_36] : memref<32x32xf32, #tpu.memory_space<vmem>>, vector<8x32xf32>
    %cst_37 = arith.constant dense<0.000000e+00> : vector<8x32xf32>
    %96 = tpu.matmul %94, %95, %cst_37 {dimension_numbers = #tpu.dot_dimension_numbers<[1], [0], [0], [1], [0, 0, 1, 1], [], []>} : vector<8x8xf32>, vector<8x32xf32>, vector<8x32xf32> -> vector<8x32xf32>
    %97 = arith.addf %76, %96 : vector<8x32xf32>
    %c0_38 = arith.constant 0 : index
    %c0_39 = arith.constant 0 : index
    %98 = vector.load %arg5[%c0_38, %c0_39] : memref<1x32xf32, #tpu.memory_space<vmem>>, vector<1x32xf32>
    %99 = vector.broadcast %98 : vector<1x32xf32> to vector<8x32xf32>
    %100 = arith.addf %97, %99 : vector<8x32xf32>
    %c0_40 = arith.constant 0 : index
    %c0_41 = arith.constant 0 : index
    %c0_42 = arith.constant 0 : index
    %101 = vector.load %arg6[%c0_40, %c0_41, %c0_42] : memref<1x8x32xf32, #tpu.memory_space<vmem>>, vector<1x8x32xf32>
    %102 = vector.shape_cast %101 : vector<1x8x32xf32> to vector<8x32xf32>
    %103 = vector.shape_cast %100 : vector<8x32xf32> to vector<1x8x32xf32>
    tpu.vector_store %arg6[%c0_40, %c0_41, %c0_42], %103 {strides = array<i32>} : memref<1x8x32xf32, #tpu.memory_space<vmem>>, vector<1x8x32xf32>,
    return
  }
  func.func @transform_0(%arg0: i32) -> (i32, i32, i32) {
    %c0_i32 = arith.constant 0 : i32
    %c0_i32_0 = arith.constant 0 : i32
    %c0_i32_1 = arith.constant 0 : i32
    return %arg0, %c0_i32, %c0_i32_0 : i32, i32, i32
  }
  func.func @transform_1(%arg0: i32) -> (i32, i32) {
    %c0_i32 = arith.constant 0 : i32
    %c0_i32_0 = arith.constant 0 : i32
    %c0_i32_1 = arith.constant 0 : i32
    return %c0_i32, %c0_i32_0 : i32, i32
  }
  func.func @transform_2(%arg0: i32) -> (i32, i32) {
    %c0_i32 = arith.constant 0 : i32
    %c0_i32_0 = arith.constant 0 : i32
    %c0_i32_1 = arith.constant 0 : i32
    return %c0_i32, %c0_i32_0 : i32, i32
  }
  func.func @transform_3(%arg0: i32) -> (i32, i32) {
    %c0_i32 = arith.constant 0 : i32
    %c0_i32_0 = arith.constant 0 : i32
    %c0_i32_1 = arith.constant 0 : i32
    return %c0_i32, %c0_i32_0 : i32, i32
  }
  func.func @transform_4(%arg0: i32) -> (i32, i32) {
    %c0_i32 = arith.constant 0 : i32
    %c0_i32_0 = arith.constant 0 : i32
    %c0_i32_1 = arith.constant 0 : i32
    return %c0_i32, %c0_i32_0 : i32, i32
  }
  func.func @transform_5(%arg0: i32) -> (i32, i32, i32) {
    %c0_i32 = arith.constant 0 : i32
    %c0_i32_0 = arith.constant 0 : i32
    %c0_i32_1 = arith.constant 0 : i32
    return %arg0, %c0_i32, %c0_i32_0 : i32, i32, i32
  }
}

</mosaic_0001>

<llo_original>
// kernel: tpu_custom_call.1
$region0: #{tpu_custom_call.1}
  #allocation0 [shape = 'u32[]', space=smem, size = 0x4, offset = 0x4, fixed_abs, tag = 'smem constant byte address 0x4 - core index']
  #allocation1 [shape = 'u32[144,128]{1,0:T(1,128)}', space=vmem, size = 0x12000, scoped, tag = 'internal scratch']
  %s0 = inlined_call_operand.hbm [shape: f32[2,8,32], index: 0, kind: input, shape index: {}]
  %s1 = inlined_call_operand.hbm [shape: f32[32,96], index: 1, kind: input, shape index: {}]
  %s2 = inlined_call_operand.vmem [shape: f32[1,96], index: 2, kind: input, shape index: {}]
  %s3 = inlined_call_operand.hbm [shape: f32[32,32], index: 3, kind: input, shape index: {}]
  %s4 = inlined_call_operand.vmem [shape: f32[1,32], index: 4, kind: input, shape index: {}]
  %s5 = inlined_call_operand.hbm [shape: f32[2,8,32], index: 5, kind: output, shape index: {}]
  %s6 = sld [smem:[#allocation0]]
  $region65: #{tpu_custom_call.1} parent=0
    _
  %s8 = ssub.s32 1, %s6
  %s9 = scalar_select 0, %s8, %s6
  $region1: #{tpu_custom_call.1} parent=0
    #allocation2 [shape = 'u8[8192]{0}', space=vmem, size = 0x2000, scoped, tag = 'input window, operand 0']
    #allocation3 [shape = 's32[2]{0}', space=sflag, size = 0x8, scoped, tag = 'scoped memory for tpu_custom_call.1']
    #allocation4 [shape = 's32[2]{0}', space=sflag, size = 0x8, scoped, tag = 'scoped memory for tpu_custom_call.1']
    #allocation5 [shape = 'u8[16384]{0}', space=vmem, size = 0x4000, scoped, tag = 'input window, operand 1, single buffered']
    #allocation6 [shape = 's32[1]{0}', space=sflag, size = 0x4, scoped, tag = 'scoped memory for tpu_custom_call.1']
    #allocation7 [shape = 'u8[16384]{0}', space=vmem, size = 0x4000, scoped, tag = 'input window, operand 3, single buffered']
    #allocation8 [shape = 'u8[8192]{0}', space=vmem, size = 0x2000, scoped, tag = 'output window, operand 0']
    %10 = vsyncpa [#allocation3], 0
    %s11 = scalar_lea.sflag [#allocation3], 1
    %12 = vsyncpa %s11, 0
    %13 = vsyncpa [#allocation6], 0
    %14 = vsyncpa [#allocation4], 0
    %s15 = scalar_lea.sflag [#allocation4], 1
    %16 = vsyncpa %s15, 0
    loop: start=0, step=1, limit=4
    $region2: #{tpu_custom_call.1} parent=1 // loop_pre_header
      _
    $region3: #{tpu_custom_call.1} parent=1 // loop_header
      %s18 = sphi 0, %s22
      %p19 = scmp.ge.s32.totalorder %s18, 4
      %s28 = sphi 0, %s30
      %s31 = sphi 0, %s28
      %s32 = sphi 0, %s31
      %s48 = sphi 0, %s32
      %s52 = sphi 0, %s52
      %s54 = sphi 0, %s52
      %s55 = sphi 0, %s54
      %s69 = sphi 0, %s55
      %s73 = sphi 0, %s73
      %s75 = sphi 0, %s73
      %s76 = sphi 0, %s75
      %s90 = sphi 0, %s76
      %s94 = sphi 0, %s94
      %s96 = sphi 0, %s94
      %s97 = sphi 0, %s96
      %s111 = sphi 0, %s97
      %s115 = sphi 0, %s115
      %s117 = sphi 0, %s115
      %s118 = sphi 0, %s117
      %s132 = sphi 0, %s118
      %s138 = sphi 0, %s140
      %s141 = sphi 0, %s138
      %s142 = sphi 0, %s141
      %s158 = sphi 0, %s142
    $region4: #{tpu_custom_call.1} parent=1 // loop_header_branch
      %21 = sbr.rel (%p19) target = $region8
    $region5: #{tpu_custom_call.1} parent=1 // loop_body
      %s23 = ssub.s32 %s18, 1
      %s24 = ssub.s32 %s18, 2
      %s25 = sadd.s32 %s18, 1
      %s26 = ssub.s32 %s18, %s25
      %p27 = scmp.eq.s32.totalorder %s26, 0
      %s29 = sadd.s32 %s28, 1
      %s30 = scalar_select %p27, %s28, %s29
      %p33 = pneg %p27
      %p34 = scmp.eq.s32.totalorder %s18, 1
      %p35 = por %p33, %p34
      %p36 = scmp.ne.s32.totalorder %s28, %s31
      %p37 = scmp.eq.s32.totalorder %s18, 0
      %p38 = por %p36, %p37
      %p39 = scmp.ne.s32.totalorder %s28, %s31
      %p40 = scmp.eq.s32.totalorder %s23, 1
      %p41 = por %p39, %p40
      %p42 = scmp.ne.s32.totalorder %s31, %s32
      %p43 = scmp.eq.s32.totalorder %s23, 0
      %p44 = por %p42, %p43
      %p45 = scmp.ne.s32.totalorder %s31, %s32
      %p46 = scmp.eq.s32.totalorder %s24, 1
      %p47 = por %p45, %p46
      %p49 = scmp.ne.s32.totalorder %s32, %s48
      %p50 = scmp.eq.s32.totalorder %s24, 0
      %p51 = por %p49, %p50
      %s53 = sadd.s32 %s52, 1
      %p56 = scmp.eq.s32.totalorder %s18, 1
      %p57 = scmp.ne.s32.totalorder %s52, %s54
      %p58 = scmp.eq.s32.totalorder %s18, 0
      %p59 = por %p57, %p58
      %p60 = scmp.ne.s32.totalorder %s52, %s54
      %p61 = scmp.eq.s32.totalorder %s23, 1
      %p62 = por %p60, %p61
      %p63 = scmp.ne.s32.totalorder %s54, %s55
      %p64 = scmp.eq.s32.totalorder %s23, 0
      %p65 = por %p63, %p64
      %p66 = scmp.ne.s32.totalorder %s54, %s55
      %p67 = scmp.eq.s32.totalorder %s24, 1
      %p68 = por %p66, %p67
      %p70 = scmp.ne.s32.totalorder %s55, %s69
      %p71 = scmp.eq.s32.totalorder %s24, 0
      %p72 = por %p70, %p71
      %s74 = sadd.s32 %s73, 1
      %p77 = scmp.eq.s32.totalorder %s18, 1
      %p78 = scmp.ne.s32.totalorder %s73, %s75
      %p79 = scmp.eq.s32.totalorder %s18, 0
      %p80 = por %p78, %p79
      %p81 = scmp.ne.s32.totalorder %s73, %s75
      %p82 = scmp.eq.s32.totalorder %s23, 1
      %p83 = por %p81, %p82
      %p84 = scmp.ne.s32.totalorder %s75, %s76
      %p85 = scmp.eq.s32.totalorder %s23, 0
      %p86 = por %p84, %p85
      %p87 = scmp.ne.s32.totalorder %s75, %s76
      %p88 = scmp.eq.s32.totalorder %s24, 1
      %p89 = por %p87, %p88
      %p91 = scmp.ne.s32.totalorder %s76, %s90
      %p92 = scmp.eq.s32.totalorder %s24, 0
      %p93 = por %p91, %p92
      %s95 = sadd.s32 %s94, 1
      %p98 = scmp.eq.s32.totalorder %s18, 1
      %p99 = scmp.ne.s32.totalorder %s94, %s96
      %p100 = scmp.eq.s32.totalorder %s18, 0
      %p101 = por %p99, %p100
      %p102 = scmp.ne.s32.totalorder %s94, %s96
      %p103 = scmp.eq.s32.totalorder %s23, 1
      %p104 = por %p102, %p103
      %p105 = scmp.ne.s32.totalorder %s96, %s97
      %p106 = scmp.eq.s32.totalorder %s23, 0
      %p107 = por %p105, %p106
      %p108 = scmp.ne.s32.totalorder %s96, %s97
      %p109 = scmp.eq.s32.totalorder %s24, 1
      %p110 = por %p108, %p109
      %p112 = scmp.ne.s32.totalorder %s97, %s111
      %p113 = scmp.eq.s32.totalorder %s24, 0
      %p114 = por %p112, %p113
      %s116 = sadd.s32 %s115, 1
      %p119 = scmp.eq.s32.totalorder %s18, 1
      %p120 = scmp.ne.s32.totalorder %s115, %s117
      %p121 = scmp.eq.s32.totalorder %s18, 0
      %p122 = por %p120, %p121
      %p123 = scmp.ne.s32.totalorder %s115, %s117
      %p124 = scmp.eq.s32.totalorder %s23, 1
      %p125 = por %p123, %p124
      %p126 = scmp.ne.s32.totalorder %s117, %s118
      %p127 = scmp.eq.s32.totalorder %s23, 0
      %p128 = por %p126, %p127
      %p129 = scmp.ne.s32.totalorder %s117, %s118
      %p130 = scmp.eq.s32.totalorder %s24, 1
      %p131 = por %p129, %p130
      %p133 = scmp.ne.s32.totalorder %s118, %s132
      %p134 = scmp.eq.s32.totalorder %s24, 0
      %p135 = por %p133, %p134
      %s136 = ssub.s32 %s18, %s25
      %p137 = scmp.eq.s32.totalorder %s136, 0
      %s139 = sadd.s32 %s138, 1
      %s140 = scalar_select %p137, %s138, %s139
      %p143 = pneg %p137
      %p144 = scmp.eq.s32.totalorder %s18, 1
      %p145 = por %p143, %p144
      %p146 = scmp.ne.s32.totalorder %s138, %s141
      %p147 = scmp.eq.s32.totalorder %s18, 0
      %p148 = por %p146, %p147
      %p149 = scmp.ne.s32.totalorder %s138, %s141
      %p150 = scmp.eq.s32.totalorder %s23, 1
      %p151 = por %p149, %p150
      %p152 = scmp.ne.s32.totalorder %s141, %s142
      %p153 = scmp.eq.s32.totalorder %s23, 0
      %p154 = por %p152, %p153
      %p155 = scmp.ne.s32.totalorder %s141, %s142
      %p156 = scmp.eq.s32.totalorder %s24, 1
      %p157 = por %p155, %p156
      %p159 = scmp.ne.s32.totalorder %s142, %s158
      %p160 = scmp.eq.s32.totalorder %s24, 0
      %p161 = por %p159, %p160
      %p162 = scmp.le.s32.totalorder 1, %s18
      %p163 = scmp.lt.s32.totalorder %s18, 3
      %p164 = pnand %p162, %p163
      %p165 = pneg %p164
      // Predicated region
      $region9: #{tpu_custom_call.1} parent=5 // pred_check
        _
      $region10: #{tpu_custom_call.1} parent=5 // pred_check_branch
        %167 = sbr.rel (%p164) target = $region12
      $region11: #{tpu_custom_call.1} parent=5 // pred_region
        %s168 = ssub.s32 %s18, 1
        // Predicated region
        $region13: #{tpu_custom_call.1} parent=11 // pred_check
          %p169 = pneg %p65
        $region14: #{tpu_custom_call.1} parent=11 // pred_check_branch
          %171 = sbr.rel (%p169) target = $region16
        $region15: #{tpu_custom_call.1} parent=11 // pred_region
          %s173 = ssub.s32 512, 512
          %174 = vsyncadd [#allocation6], %s173
          %s175 = sshll.u32 [#allocation5], 4
          %s176 = int_to_ptr.vmem [resolvable:$true] %s175
          %181 = dma.hbm_to_vmem [thread:$0]  %s1, 512, %s176, [#allocation6], 128, 128, 8
        $region16: #{tpu_custom_call.1} parent=11 // pred_fallthru
          _
        // Predicated region
        $region17: #{tpu_custom_call.1} parent=11 // pred_check
          %p182 = pneg %p86
        $region18: #{tpu_custom_call.1} parent=11 // pred_check_branch
          %184 = sbr.rel (%p182) target = $region20
        $region19: #{tpu_custom_call.1} parent=11 // pred_region
          _
        $region20: #{tpu_custom_call.1} parent=11 // pred_fallthru
          _
        // Predicated region
        $region21: #{tpu_custom_call.1} parent=11 // pred_check
          %p185 = pneg %p107
        $region22: #{tpu_custom_call.1} parent=11 // pred_check_branch
          %187 = sbr.rel (%p185) target = $region24
        $region23: #{tpu_custom_call.1} parent=11 // pred_region
          %s189 = ssub.s32 512, 512
          %190 = vsyncadd [#allocation6], %s189
          %s191 = sshll.u32 [#allocation7], 4
          %s192 = int_to_ptr.vmem [resolvable:$true] %s191
          %197 = dma.hbm_to_vmem [thread:$0]  %s3, 512, %s192, [#allocation6], 128, 128, 8
        $region24: #{tpu_custom_call.1} parent=11 // pred_fallthru
          _
        // Predicated region
        $region25: #{tpu_custom_call.1} parent=11 // pred_check
          %p198 = pneg %p128
        $region26: #{tpu_custom_call.1} parent=11 // pred_check_branch
          %200 = sbr.rel (%p198) target = $region28
        $region27: #{tpu_custom_call.1} parent=11 // pred_region
          _
        $region28: #{tpu_custom_call.1} parent=11 // pred_fallthru
          _
      $region12: #{tpu_custom_call.1} parent=5 // pred_fallthru
        _
      %p201 = scmp.lt.s32.totalorder %s18, 2
      // Predicated region
      $region29: #{tpu_custom_call.1} parent=5 // pred_check
        %p202 = pneg %p201
      $region30: #{tpu_custom_call.1} parent=5 // pred_check_branch
        %204 = sbr.rel (%p202) target = $region32
      $region31: #{tpu_custom_call.1} parent=5 // pred_region
        // Predicated region
        $region33: #{tpu_custom_call.1} parent=31 // pred_check
          %p205 = pneg %p38
        $region34: #{tpu_custom_call.1} parent=31 // pred_check_branch
          %207 = sbr.rel (%p205) target = $region36
        $region35: #{tpu_custom_call.1} parent=31 // pred_region
          %s208 = sand.u32 %s28, 1
          %s209 = scalar_lea.sflag [#allocation3], %s208
          %s210 = sand.u32 %s28, 1
          %s211 = smul.addr %s210, 8
          %s212 = scalar_lea.vmem [#allocation2], %s211
          %s214 = ssub.s32 128, 128
          %215 = vsyncadd %s209, %s214
          %s216 = smul.addr %s18, 128
          %s217 = scalar_lea.hbm %s0, %s216
          %s219 = sshll.u32 %s212, 4
          %s220 = int_to_ptr.vmem [resolvable:$true] %s219
          %222 = dma.hbm_to_vmem [thread:$0]  %s217, 128, %s220, %s209
        $region36: #{tpu_custom_call.1} parent=31 // pred_fallthru
          _
      $region32: #{tpu_custom_call.1} parent=5 // pred_fallthru
        _
      %p223 = scmp.le.s32.totalorder 1, %s18
      %p224 = scmp.lt.s32.totalorder %s18, 3
      %p225 = pnand %p223, %p224
      %p226 = pneg %p225
      // Predicated region
      $region37: #{tpu_custom_call.1} parent=5 // pred_check
        _
      $region38: #{tpu_custom_call.1} parent=5 // pred_check_branch
        %228 = sbr.rel (%p225) target = $region40
      $region39: #{tpu_custom_call.1} parent=5 // pred_region
        %s229 = ssub.s32 %s18, 1
        %s230 = sand.u32 %s31, 1
        %s231 = scalar_lea.sflag [#allocation3], %s230
        %s232 = sand.u32 %s31, 1
        %s233 = smul.addr %s232, 8
        %s234 = scalar_lea.vmem [#allocation2], %s233
        // Predicated region
        $region41: #{tpu_custom_call.1} parent=39 // pred_check
          %p235 = pneg %p44
        $region42: #{tpu_custom_call.1} parent=39 // pred_check_branch
          %237 = sbr.rel (%p235) target = $region44
        $region43: #{tpu_custom_call.1} parent=39 // pred_region
          %238 = dma.done %s231, 128
        $region44: #{tpu_custom_call.1} parent=39 // pred_fallthru
          _
        // Predicated region
        $region45: #{tpu_custom_call.1} parent=39 // pred_check
          %p239 = pneg %p65
        $region46: #{tpu_custom_call.1} parent=39 // pred_check_branch
          %241 = sbr.rel (%p239) target = $region48
        $region47: #{tpu_custom_call.1} parent=39 // pred_region
          %242 = dma.done [#allocation6], 512
        $region48: #{tpu_custom_call.1} parent=39 // pred_fallthru
          _
        // Predicated region
        $region49: #{tpu_custom_call.1} parent=39 // pred_check
          %p243 = pneg %p107
        $region50: #{tpu_custom_call.1} parent=39 // pred_check_branch
          %245 = sbr.rel (%p243) target = $region52
        $region51: #{tpu_custom_call.1} parent=39 // pred_region
          %246 = dma.done [#allocation6], 512
        $region52: #{tpu_custom_call.1} parent=39 // pred_fallthru
          _
        %s247 = sand.u32 %s31, 1
        %s248 = scalar_lea.sflag [#allocation3], %s247
        %s249 = sand.u32 %s31, 1
        %s250 = smul.addr %s249, 8
        %s251 = scalar_lea.vmem [#allocation2], %s250
        %p252 = pneg %p44
        %p253 = pneg %p41
        %p254 = pneg %p65
        %p255 = pneg %p62
        %p256 = pneg %p86
        %p257 = pneg %p83
        %p258 = pneg %p107
        %p259 = pneg %p104
        %p260 = pneg %p128
        %p261 = pneg %p125
        %p262 = pneg %p154
        %p263 = pneg %p151
        %s264 = sand.u32 %s141, 1
        %s265 = scalar_lea.sflag [#allocation4], %s264
        %s266 = sand.u32 %s141, 1
        %s267 = smul.addr %s266, 8
        %s268 = scalar_lea.vmem [#allocation8], %s267
        %v269 = vld [vmem:[%s234] sm:$0xff]
        %v270 = vld [vmem:[#allocation5] sm:$0xff]
        %v271 = vld [vmem:[#allocation5 + $0x8] sm:$0xff]
        %v272 = vld [vmem:[#allocation5 + $0x10] sm:$0xff]
        %v273 = vld [vmem:[#allocation5 + $0x18] sm:$0xff]
        %v274 = vld [vmem:[%s2] sm:$0x1]
        %v276 = vlaneseq
        %v277 = vshrl.u32 %v276, 7
        %v278 = vsub.s32 0, %v277
        %v279 = vrot.slane %v274, %v278
        %vm281 = vcmask 261120
        %v283 = vsel %vm281, %v269, 0
        %285 = vmatprep.subr.mxu0 0.0
        %286 = vmatpush1.msra.mxu0 %v270
        %287 = vmatprep.subr.mxu0 0.0
        %288 = vmatpush1.msra.mxu0 %v271
        %289 = vmatprep.subr.mxu0 0.0
        %290 = vmatpush1.msra.mxu0 %v272
        %291 = vmatprep.subr.mxu0 0.0
        %292 = vmatpush1.msra.mxu0 %v273
        %293 = vmatprep.subr.mxu0 0.0
        %294 = vmatpush1.msra.mxu0 0.0
        %295 = vmatprep.subr.mxu0 0.0
        %296 = vmatpush1.msra.mxu0 0.0
        %297 = vmatprep.subr.mxu0 0.0
        %298 = vmatpush1.msra.mxu0 0.0
        %299 = vmatprep.subr.mxu0 0.0
        %300 = vmatpush1.msra.mxu0 0.0
        %301 = vmatprep.subr.mxu0 0.0
        %302 = vmatpush1.msra.mxu0 0.0
        %303 = vmatprep.subr.mxu0 0.0
        %304 = vmatpush1.msra.mxu0 0.0
        %305 = vmatprep.subr.mxu0 0.0
        %306 = vmatpush1.msra.mxu0 0.0
        %307 = vmatprep.subr.mxu0 0.0
        %308 = vmatpush1.msra.mxu0 0.0
        %309 = vmatprep.subr.mxu0 0.0
        %310 = vmatpush1.msra.mxu0 0.0
        %311 = vmatprep.subr.mxu0 0.0
        %312 = vmatpush1.msra.mxu0 0.0
        %313 = vmatprep.subr.mxu0 0.0
        %314 = vmatpush1.msra.mxu0 0.0
        %315 = vmatprep.subr.mxu0 0.0
        %316 = vmatpush1.msra.mxu0 0.0
        %317 = vmatprep.subr.mxu0 0.0
        %318 = vmatpush1.msra.mxu0 0.0
        %319 = vmatprep.subr.mxu0 0.0
        %320 = vmatpush1.msra.mxu0 0.0
        %321 = vmatprep.subr.mxu0 0.0
        %322 = vmatpush1.msra.mxu0 0.0
        %323 = vmatprep.subr.mxu0 0.0
        %324 = vmatpush1.msra.mxu0 0.0
        %325 = vmatprep.subr.mxu0 0.0
        %326 = vmatpush1.msra.mxu0 0.0
        %327 = vmatprep.subr.mxu0 0.0
        %328 = vmatpush1.msra.mxu0 0.0
        %329 = vmatprep.subr.mxu0 0.0
        %330 = vmatpush1.msra.mxu0 0.0
        %331 = vmatprep.subr.mxu0 0.0
        %332 = vmatpush1.msra.mxu0 0.0
        %333 = vmatprep.subr.mxu0 0.0
        %334 = vmatpush1.msra.mxu0 0.0
        %335 = vmatprep.subr.mxu0 0.0
        %336 = vmatpush1.msra.mxu0 0.0
        %337 = vmatprep.subr.mxu0 0.0
        %338 = vmatpush1.msra.mxu0 0.0
        %339 = vmatprep.subr.mxu0 0.0
        %340 = vmatpush1.msra.mxu0 0.0
        %341 = vmatprep.subr.mxu0 0.0
        %342 = vmatpush1.msra.mxu0 0.0
        %343 = vmatprep.subr.mxu0 0.0
        %344 = vmatpush1.msra.mxu0 0.0
        %345 = vmatprep.subr.mxu0 0.0
        %346 = vmatpush1.msra.mxu0 0.0
        %347 = vmatprep.subr.mxu0 0.0
        %348 = vmatpush1.msra.mxu0 0.0
        %349 = vmatprep.mubr.f32.mxu0 0.0
        %350 = vmatmul.mubr.f32.gmra.mrb[0].mxu0 %v283
        %v351 = vpop.f32.mrb[0].mxu0
        %v352 = vadd.f32 %v279, %v351
        %v353 = vpop.f32.mrb[0].mxu0
        %354 = vdwg.mxu0
        %v355 = vlaneseq
        %v356 = vshrl.u32 %v355, 7
        %v357 = vlaneseq
        %v358 = vand.u32 %v357, 127
        %vm359 = vcmp.ge.s32.totalorder %v356, %v358
        %v360 = vsel %vm359, 0.0, -1e+30
        %362 = vrot.lane.b32.xlu0 %v352, 96
        %v363 = vpop.permute.xlu0 %362
        %vm364 = vcmask 64512
        %v365 = vsel %vm364, %v352, 0
        %v367 = vsel %vm364, %v363, 0
        %369 = vmatprep.subr.mxu0 0.0
        %370 = vmatpush1.xpose.msra.mxu0 %v367
        %371 = vmatprep.subr.mxu0 0.0
        %372 = vmatpush1.xpose.msra.mxu0 0.0
        %373 = vmatprep.subr.mxu0 0.0
        %374 = vmatpush1.xpose.msra.mxu0 0.0
        %375 = vmatprep.subr.mxu0 0.0
        %376 = vmatpush1.xpose.msra.mxu0 0.0
        %377 = vmatprep.subr.mxu0 0.0
        %378 = vmatpush1.xpose.msra.mxu0 0.0
        %379 = vmatprep.subr.mxu0 0.0
        %380 = vmatpush1.xpose.msra.mxu0 0.0
        %381 = vmatprep.subr.mxu0 0.0
        %382 = vmatpush1.xpose.msra.mxu0 0.0
        %383 = vmatprep.subr.mxu0 0.0
        %384 = vmatpush1.xpose.msra.mxu0 0.0
        %385 = vmatprep.subr.mxu0 0.0
        %386 = vmatpush1.xpose.msra.mxu0 0.0
        %387 = vmatprep.subr.mxu0 0.0
        %388 = vmatpush1.xpose.msra.mxu0 0.0
        %389 = vmatprep.subr.mxu0 0.0
        %390 = vmatpush1.xpose.msra.mxu0 0.0
        %391 = vmatprep.subr.mxu0 0.0
        %392 = vmatpush1.xpose.msra.mxu0 0.0
        %393 = vmatprep.subr.mxu0 0.0
        %394 = vmatpush1.xpose.msra.mxu0 0.0
        %395 = vmatprep.subr.mxu0 0.0
        %396 = vmatpush1.xpose.msra.mxu0 0.0
        %397 = vmatprep.subr.mxu0 0.0
        %398 = vmatpush1.xpose.msra.mxu0 0.0
        %399 = vmatprep.subr.mxu0 0.0
        %400 = vmatpush1.xpose.msra.mxu0 0.0
        %401 = vmatprep.subr.mxu0 0.0
        %402 = vmatpush1.xpose.msra.mxu0 0.0
        %403 = vmatprep.subr.mxu0 0.0
        %404 = vmatpush1.xpose.msra.mxu0 0.0
        %405 = vmatprep.subr.mxu0 0.0
        %406 = vmatpush1.xpose.msra.mxu0 0.0
        %407 = vmatprep.subr.mxu0 0.0
        %408 = vmatpush1.xpose.msra.mxu0 0.0
        %409 = vmatprep.subr.mxu0 0.0
        %410 = vmatpush1.xpose.msra.mxu0 0.0
        %411 = vmatprep.subr.mxu0 0.0
        %412 = vmatpush1.xpose.msra.mxu0 0.0
        %413 = vmatprep.subr.mxu0 0.0
        %414 = vmatpush1.xpose.msra.mxu0 0.0
        %415 = vmatprep.subr.mxu0 0.0
        %416 = vmatpush1.xpose.msra.mxu0 0.0
        %417 = vmatprep.subr.mxu0 0.0
        %418 = vmatpush1.xpose.msra.mxu0 0.0
        %419 = vmatprep.subr.mxu0 0.0
        %420 = vmatpush1.xpose.msra.mxu0 0.0
        %421 = vmatprep.subr.mxu0 0.0
        %422 = vmatpush1.xpose.msra.mxu0 0.0
        %423 = vmatprep.subr.mxu0 0.0
        %424 = vmatpush1.xpose.msra.mxu0 0.0
        %425 = vmatprep.subr.mxu0 0.0
        %426 = vmatpush1.xpose.msra.mxu0 0.0
        %427 = vmatprep.subr.mxu0 0.0
        %428 = vmatpush1.xpose.msra.mxu0 0.0
        %429 = vmatprep.subr.mxu0 0.0
        %430 = vmatpush1.xpose.msra.mxu0 0.0
        %431 = vmatprep.subr.mxu0 0.0
        %432 = vmatpush1.xpose.msra.mxu0 0.0
        %433 = vmatprep.mubr.f32.mxu0 0.0
        %434 = vmatmul.mubr.f32.gmra.mrb[0].mxu0 %v365
        %v435 = vpop.f32.mrb[0].mxu0
        %v436 = vadd.f32 0.0, %v435
        %v437 = vpop.f32.mrb[0].mxu0
        %438 = vdwg.mxu0
        %v439 = vmul.f32 %v436, 0.35355338
        %v440 = vadd.f32 %v439, %v360
        %v441 = vsel %vm364, %v440, -inf
        %442 = vmax.xlane.f32.xlu0 %v441
        %v443 = vpop.xlane.xlu0 %442
        %v444 = vsub.f32 %v440, %v443
        %v445 = vmul.f32 %v444, 1.442695
        %v446 = vpow.pop %v445
        %v447 = vsel %vm364, %v446, 0.0
        %448 = vadd.xlane.f32.xlu0 %v447
        %v449 = vpop.xlane.xlu0 %448
        %v450 = vrcp.pop %v449
        %v451 = vmul.f32 %v446, %v450
        %452 = vrot.lane.b32.xlu0 %v352, 64
        %v453 = vpop.permute.xlu0 %452
        %v456 = vsel %vm364, %v451, 0
        %458 = vmatprep.subr.mxu0 0.0
        %459 = vmatpush1.msra.mxu0 %v453
        %460 = vmatprep.subr.mxu0 0.0
        %461 = vmatpush1.msra.mxu0 0.0
        %462 = vmatprep.subr.mxu0 0.0
        %463 = vmatpush1.msra.mxu0 0.0
        %464 = vmatprep.subr.mxu0 0.0
        %465 = vmatpush1.msra.mxu0 0.0
        %466 = vmatprep.subr.mxu0 0.0
        %467 = vmatpush1.msra.mxu0 0.0
        %468 = vmatprep.subr.mxu0 0.0
        %469 = vmatpush1.msra.mxu0 0.0
        %470 = vmatprep.subr.mxu0 0.0
        %471 = vmatpush1.msra.mxu0 0.0
        %472 = vmatprep.subr.mxu0 0.0
        %473 = vmatpush1.msra.mxu0 0.0
        %474 = vmatprep.subr.mxu0 0.0
        %475 = vmatpush1.msra.mxu0 0.0
        %476 = vmatprep.subr.mxu0 0.0
        %477 = vmatpush1.msra.mxu0 0.0
        %478 = vmatprep.subr.mxu0 0.0
        %479 = vmatpush1.msra.mxu0 0.0
        %480 = vmatprep.subr.mxu0 0.0
        %481 = vmatpush1.msra.mxu0 0.0
        %482 = vmatprep.subr.mxu0 0.0
        %483 = vmatpush1.msra.mxu0 0.0
        %484 = vmatprep.subr.mxu0 0.0
        %485 = vmatpush1.msra.mxu0 0.0
        %486 = vmatprep.subr.mxu0 0.0
        %487 = vmatpush1.msra.mxu0 0.0
        %488 = vmatprep.subr.mxu0 0.0
        %489 = vmatpush1.msra.mxu0 0.0
        %490 = vmatprep.subr.mxu0 0.0
        %491 = vmatpush1.msra.mxu0 0.0
        %492 = vmatprep.subr.mxu0 0.0
        %493 = vmatpush1.msra.mxu0 0.0
        %494 = vmatprep.subr.mxu0 0.0
        %495 = vmatpush1.msra.mxu0 0.0
        %496 = vmatprep.subr.mxu0 0.0
        %497 = vmatpush1.msra.mxu0 0.0
        %498 = vmatprep.subr.mxu0 0.0
        %499 = vmatpush1.msra.mxu0 0.0
        %500 = vmatprep.subr.mxu0 0.0
        %501 = vmatpush1.msra.mxu0 0.0
        %502 = vmatprep.subr.mxu0 0.0
        %503 = vmatpush1.msra.mxu0 0.0
        %504 = vmatprep.subr.mxu0 0.0
        %505 = vmatpush1.msra.mxu0 0.0
        %506 = vmatprep.subr.mxu0 0.0
        %507 = vmatpush1.msra.mxu0 0.0
        %508 = vmatprep.subr.mxu0 0.0
        %509 = vmatpush1.msra.mxu0 0.0
        %510 = vmatprep.subr.mxu0 0.0
        %511 = vmatpush1.msra.mxu0 0.0
        %512 = vmatprep.subr.mxu0 0.0
        %513 = vmatpush1.msra.mxu0 0.0
        %514 = vmatprep.subr.mxu0 0.0
        %515 = vmatpush1.msra.mxu0 0.0
        %516 = vmatprep.subr.mxu0 0.0
        %517 = vmatpush1.msra.mxu0 0.0
        %518 = vmatprep.subr.mxu0 0.0
        %519 = vmatpush1.msra.mxu0 0.0
        %520 = vmatprep.subr.mxu0 0.0
        %521 = vmatpush1.msra.mxu0 0.0
        %522 = vmatprep.mubr.f32.mxu0 0.0
        %523 = vmatmul.mubr.f32.gmra.mrb[0].mxu0 %v456
        %v524 = vpop.f32.mrb[0].mxu0
        %v525 = vadd.f32 0.0, %v524
        %v526 = vpop.f32.mrb[0].mxu0
        %527 = vdwg.mxu0
        %v528 = vld [vmem:[#allocation7] sm:$0xff]
        %529 = vrot.lane.b32.xlu0 %v352, 120
        %v530 = vpop.permute.xlu0 %529
        %531 = vrot.lane.b32.xlu0 %v352, 88
        %v532 = vpop.permute.xlu0 %531
        %v533 = vsel %vm364, %v530, 0
        %v535 = vsel %vm364, %v532, 0
        %537 = vmatprep.subr.mxu0 0.0
        %538 = vmatpush1.xpose.msra.mxu0 %v535
        %539 = vmatprep.subr.mxu0 0.0
        %540 = vmatpush1.xpose.msra.mxu0 0.0
        %541 = vmatprep.subr.mxu0 0.0
        %542 = vmatpush1.xpose.msra.mxu0 0.0
        %543 = vmatprep.subr.mxu0 0.0
        %544 = vmatpush1.xpose.msra.mxu0 0.0
        %545 = vmatprep.subr.mxu0 0.0
        %546 = vmatpush1.xpose.msra.mxu0 0.0
        %547 = vmatprep.subr.mxu0 0.0
        %548 = vmatpush1.xpose.msra.mxu0 0.0
        %549 = vmatprep.subr.mxu0 0.0
        %550 = vmatpush1.xpose.msra.mxu0 0.0
        %551 = vmatprep.subr.mxu0 0.0
        %552 = vmatpush1.xpose.msra.mxu0 0.0
        %553 = vmatprep.subr.mxu0 0.0
        %554 = vmatpush1.xpose.msra.mxu0 0.0
        %555 = vmatprep.subr.mxu0 0.0
        %556 = vmatpush1.xpose.msra.mxu0 0.0
        %557 = vmatprep.subr.mxu0 0.0
        %558 = vmatpush1.xpose.msra.mxu0 0.0
        %559 = vmatprep.subr.mxu0 0.0
        %560 = vmatpush1.xpose.msra.mxu0 0.0
        %561 = vmatprep.subr.mxu0 0.0
        %562 = vmatpush1.xpose.msra.mxu0 0.0
        %563 = vmatprep.subr.mxu0 0.0
        %564 = vmatpush1.xpose.msra.mxu0 0.0
        %565 = vmatprep.subr.mxu0 0.0
        %566 = vmatpush1.xpose.msra.mxu0 0.0
        %567 = vmatprep.subr.mxu0 0.0
        %568 = vmatpush1.xpose.msra.mxu0 0.0
        %569 = vmatprep.subr.mxu0 0.0
        %570 = vmatpush1.xpose.msra.mxu0 0.0
        %571 = vmatprep.subr.mxu0 0.0
        %572 = vmatpush1.xpose.msra.mxu0 0.0
        %573 = vmatprep.subr.mxu0 0.0
        %574 = vmatpush1.xpose.msra.mxu0 0.0
        %575 = vmatprep.subr.mxu0 0.0
        %576 = vmatpush1.xpose.msra.mxu0 0.0
        %577 = vmatprep.subr.mxu0 0.0
        %578 = vmatpush1.xpose.msra.mxu0 0.0
        %579 = vmatprep.subr.mxu0 0.0
        %580 = vmatpush1.xpose.msra.mxu0 0.0
        %581 = vmatprep.subr.mxu0 0.0
        %582 = vmatpush1.xpose.msra.mxu0 0.0
        %583 = vmatprep.subr.mxu0 0.0
        %584 = vmatpush1.xpose.msra.mxu0 0.0
        %585 = vmatprep.subr.mxu0 0.0
        %586 = vmatpush1.xpose.msra.mxu0 0.0
        %587 = vmatprep.subr.mxu0 0.0
        %588 = vmatpush1.xpose.msra.mxu0 0.0
        %589 = vmatprep.subr.mxu0 0.0
        %590 = vmatpush1.xpose.msra.mxu0 0.0
        %591 = vmatprep.subr.mxu0 0.0
        %592 = vmatpush1.xpose.msra.mxu0 0.0
        %593 = vmatprep.subr.mxu0 0.0
        %594 = vmatpush1.xpose.msra.mxu0 0.0
        %595 = vmatprep.subr.mxu0 0.0
        %596 = vmatpush1.xpose.msra.mxu0 0.0
        %597 = vmatprep.subr.mxu0 0.0
        %598 = vmatpush1.xpose.msra.mxu0 0.0
        %599 = vmatprep.subr.mxu0 0.0
        %600 = vmatpush1.xpose.msra.mxu0 0.0
        %601 = vmatprep.mubr.f32.mxu0 0.0
        %602 = vmatmul.mubr.f32.gmra.mrb[0].mxu0 %v533
        %v603 = vpop.f32.mrb[0].mxu0
        %v604 = vadd.f32 0.0, %v603
        %v605 = vpop.f32.mrb[0].mxu0
        %606 = vdwg.mxu0
        %v607 = vmul.f32 %v604, 0.35355338
        %v608 = vadd.f32 %v607, %v360
        %v609 = vsel %vm364, %v608, -inf
        %610 = vmax.xlane.f32.xlu0 %v609
        %v611 = vpop.xlane.xlu0 %610
        %v612 = vsub.f32 %v608, %v611
        %v613 = vmul.f32 %v612, 1.442695
        %v614 = vpow.pop %v613
        %v615 = vsel %vm364, %v614, 0.0
        %616 = vadd.xlane.f32.xlu0 %v615
        %v617 = vpop.xlane.xlu0 %616
        %v618 = vrcp.pop %v617
        %v619 = vmul.f32 %v614, %v618
        %620 = vrot.lane.b32.xlu0 %v352, 56
        %v621 = vpop.permute.xlu0 %620
        %v624 = vsel %vm364, %v619, 0
        %626 = vmatprep.subr.mxu0 0.0
        %627 = vmatpush1.msra.mxu0 %v621
        %628 = vmatprep.subr.mxu0 0.0
        %629 = vmatpush1.msra.mxu0 0.0
        %630 = vmatprep.subr.mxu0 0.0
        %631 = vmatpush1.msra.mxu0 0.0
        %632 = vmatprep.subr.mxu0 0.0
        %633 = vmatpush1.msra.mxu0 0.0
        %634 = vmatprep.subr.mxu0 0.0
        %635 = vmatpush1.msra.mxu0 0.0
        %636 = vmatprep.subr.mxu0 0.0
        %637 = vmatpush1.msra.mxu0 0.0
        %638 = vmatprep.subr.mxu0 0.0
        %639 = vmatpush1.msra.mxu0 0.0
        %640 = vmatprep.subr.mxu0 0.0
        %641 = vmatpush1.msra.mxu0 0.0
        %642 = vmatprep.subr.mxu0 0.0
        %643 = vmatpush1.msra.mxu0 0.0
        %644 = vmatprep.subr.mxu0 0.0
        %645 = vmatpush1.msra.mxu0 0.0
        %646 = vmatprep.subr.mxu0 0.0
        %647 = vmatpush1.msra.mxu0 0.0
        %648 = vmatprep.subr.mxu0 0.0
        %649 = vmatpush1.msra.mxu0 0.0
        %650 = vmatprep.subr.mxu0 0.0
        %651 = vmatpush1.msra.mxu0 0.0
        %652 = vmatprep.subr.mxu0 0.0
        %653 = vmatpush1.msra.mxu0 0.0
        %654 = vmatprep.subr.mxu0 0.0
        %655 = vmatpush1.msra.mxu0 0.0
        %656 = vmatprep.subr.mxu0 0.0
        %657 = vmatpush1.msra.mxu0 0.0
        %658 = vmatprep.subr.mxu0 0.0
        %659 = vmatpush1.msra.mxu0 0.0
        %660 = vmatprep.subr.mxu0 0.0
        %661 = vmatpush1.msra.mxu0 0.0
        %662 = vmatprep.subr.mxu0 0.0
        %663 = vmatpush1.msra.mxu0 0.0
        %664 = vmatprep.subr.mxu0 0.0
        %665 = vmatpush1.msra.mxu0 0.0
        %666 = vmatprep.subr.mxu0 0.0
        %667 = vmatpush1.msra.mxu0 0.0
        %668 = vmatprep.subr.mxu0 0.0
        %669 = vmatpush1.msra.mxu0 0.0
        %670 = vmatprep.subr.mxu0 0.0
        %671 = vmatpush1.msra.mxu0 0.0
        %672 = vmatprep.subr.mxu0 0.0
        %673 = vmatpush1.msra.mxu0 0.0
        %674 = vmatprep.subr.mxu0 0.0
        %675 = vmatpush1.msra.mxu0 0.0
        %676 = vmatprep.subr.mxu0 0.0
        %677 = vmatpush1.msra.mxu0 0.0
        %678 = vmatprep.subr.mxu0 0.0
        %679 = vmatpush1.msra.mxu0 0.0
        %680 = vmatprep.subr.mxu0 0.0
        %681 = vmatpush1.msra.mxu0 0.0
        %682 = vmatprep.subr.mxu0 0.0
        %683 = vmatpush1.msra.mxu0 0.0
        %684 = vmatprep.subr.mxu0 0.0
        %685 = vmatpush1.msra.mxu0 0.0
        %686 = vmatprep.subr.mxu0 0.0
        %687 = vmatpush1.msra.mxu0 0.0
        %688 = vmatprep.subr.mxu0 0.0
        %689 = vmatpush1.msra.mxu0 0.0
        %690 = vmatprep.mubr.f32.mxu0 0.0
        %691 = vmatmul.mubr.f32.gmra.mrb[0].mxu0 %v624
        %v692 = vpop.f32.mrb[0].mxu0
        %v693 = vadd.f32 0.0, %v692
        %v694 = vpop.f32.mrb[0].mxu0
        %695 = vdwg.mxu0
        %v696 = vld [vmem:[#allocation7 + $0x8] sm:$0xff]
        %v698 = vsel %vm364, %v693, 0
        %700 = vmatprep.subr.mxu0 0.0
        %701 = vmatpush1.msra.mxu0 %v696
        %702 = vmatprep.subr.mxu0 0.0
        %703 = vmatpush1.msra.mxu0 0.0
        %704 = vmatprep.subr.mxu0 0.0
        %705 = vmatpush1.msra.mxu0 0.0
        %706 = vmatprep.subr.mxu0 0.0
        %707 = vmatpush1.msra.mxu0 0.0
        %708 = vmatprep.subr.mxu0 0.0
        %709 = vmatpush1.msra.mxu0 0.0
        %710 = vmatprep.subr.mxu0 0.0
        %711 = vmatpush1.msra.mxu0 0.0
        %712 = vmatprep.subr.mxu0 0.0
        %713 = vmatpush1.msra.mxu0 0.0
        %714 = vmatprep.subr.mxu0 0.0
        %715 = vmatpush1.msra.mxu0 0.0
        %716 = vmatprep.subr.mxu0 0.0
        %717 = vmatpush1.msra.mxu0 0.0
        %718 = vmatprep.subr.mxu0 0.0
        %719 = vmatpush1.msra.mxu0 0.0
        %720 = vmatprep.subr.mxu0 0.0
        %721 = vmatpush1.msra.mxu0 0.0
        %722 = vmatprep.subr.mxu0 0.0
        %723 = vmatpush1.msra.mxu0 0.0
        %724 = vmatprep.subr.mxu0 0.0
        %725 = vmatpush1.msra.mxu0 0.0
        %726 = vmatprep.subr.mxu0 0.0
        %727 = vmatpush1.msra.mxu0 0.0
        %728 = vmatprep.subr.mxu0 0.0
        %729 = vmatpush1.msra.mxu0 0.0
        %730 = vmatprep.subr.mxu0 0.0
        %731 = vmatpush1.msra.mxu0 0.0
        %732 = vmatprep.subr.mxu0 0.0
        %733 = vmatpush1.msra.mxu0 0.0
        %734 = vmatprep.subr.mxu0 0.0
        %735 = vmatpush1.msra.mxu0 0.0
        %736 = vmatprep.subr.mxu0 0.0
        %737 = vmatpush1.msra.mxu0 0.0
        %738 = vmatprep.subr.mxu0 0.0
        %739 = vmatpush1.msra.mxu0 0.0
        %740 = vmatprep.subr.mxu0 0.0
        %741 = vmatpush1.msra.mxu0 0.0
        %742 = vmatprep.subr.mxu0 0.0
        %743 = vmatpush1.msra.mxu0 0.0
        %744 = vmatprep.subr.mxu0 0.0
        %745 = vmatpush1.msra.mxu0 0.0
        %746 = vmatprep.subr.mxu0 0.0
        %747 = vmatpush1.msra.mxu0 0.0
        %748 = vmatprep.subr.mxu0 0.0
        %749 = vmatpush1.msra.mxu0 0.0
        %750 = vmatprep.subr.mxu0 0.0
        %751 = vmatpush1.msra.mxu0 0.0
        %752 = vmatprep.subr.mxu0 0.0
        %753 = vmatpush1.msra.mxu0 0.0
        %754 = vmatprep.subr.mxu0 0.0
        %755 = vmatpush1.msra.mxu0 0.0
        %756 = vmatprep.subr.mxu0 0.0
        %757 = vmatpush1.msra.mxu0 0.0
        %758 = vmatprep.subr.mxu0 0.0
        %759 = vmatpush1.msra.mxu0 0.0
        %760 = vmatprep.subr.mxu0 0.0
        %761 = vmatpush1.msra.mxu0 0.0
        %762 = vmatprep.subr.mxu0 0.0
        %763 = vmatpush1.msra.mxu0 0.0
        %764 = vmatprep.mubr.f32.mxu0 0.0
        %765 = vmatmul.mubr.f32.gmra.mrb[0].mxu0 %v698
        %v766 = vpop.f32.mrb[0].mxu0
        %v767 = vadd.f32 0.0, %v766
        %v768 = vpop.f32.mrb[0].mxu0
        %769 = vdwg.mxu0
        %v771 = vsel %vm364, %v525, 0
        %773 = vmatprep.subr.mxu0 0.0
        %774 = vmatpush1.msra.mxu0 %v528
        %775 = vmatprep.subr.mxu0 0.0
        %776 = vmatpush1.msra.mxu0 0.0
        %777 = vmatprep.subr.mxu0 0.0
        %778 = vmatpush1.msra.mxu0 0.0
        %779 = vmatprep.subr.mxu0 0.0
        %780 = vmatpush1.msra.mxu0 0.0
        %781 = vmatprep.subr.mxu0 0.0
        %782 = vmatpush1.msra.mxu0 0.0
        %783 = vmatprep.subr.mxu0 0.0
        %784 = vmatpush1.msra.mxu0 0.0
        %785 = vmatprep.subr.mxu0 0.0
        %786 = vmatpush1.msra.mxu0 0.0
        %787 = vmatprep.subr.mxu0 0.0
        %788 = vmatpush1.msra.mxu0 0.0
        %789 = vmatprep.subr.mxu0 0.0
        %790 = vmatpush1.msra.mxu0 0.0
        %791 = vmatprep.subr.mxu0 0.0
        %792 = vmatpush1.msra.mxu0 0.0
        %793 = vmatprep.subr.mxu0 0.0
        %794 = vmatpush1.msra.mxu0 0.0
        %795 = vmatprep.subr.mxu0 0.0
        %796 = vmatpush1.msra.mxu0 0.0
        %797 = vmatprep.subr.mxu0 0.0
        %798 = vmatpush1.msra.mxu0 0.0
        %799 = vmatprep.subr.mxu0 0.0
        %800 = vmatpush1.msra.mxu0 0.0
        %801 = vmatprep.subr.mxu0 0.0
        %802 = vmatpush1.msra.mxu0 0.0
        %803 = vmatprep.subr.mxu0 0.0
        %804 = vmatpush1.msra.mxu0 0.0
        %805 = vmatprep.subr.mxu0 0.0
        %806 = vmatpush1.msra.mxu0 0.0
        %807 = vmatprep.subr.mxu0 0.0
        %808 = vmatpush1.msra.mxu0 0.0
        %809 = vmatprep.subr.mxu0 0.0
        %810 = vmatpush1.msra.mxu0 0.0
        %811 = vmatprep.subr.mxu0 0.0
        %812 = vmatpush1.msra.mxu0 0.0
        %813 = vmatprep.subr.mxu0 0.0
        %814 = vmatpush1.msra.mxu0 0.0
        %815 = vmatprep.subr.mxu0 0.0
        %816 = vmatpush1.msra.mxu0 0.0
        %817 = vmatprep.subr.mxu0 0.0
        %818 = vmatpush1.msra.mxu0 0.0
        %819 = vmatprep.subr.mxu0 0.0
        %820 = vmatpush1.msra.mxu0 0.0
        %821 = vmatprep.subr.mxu0 0.0
        %822 = vmatpush1.msra.mxu0 0.0
        %823 = vmatprep.subr.mxu0 0.0
        %824 = vmatpush1.msra.mxu0 0.0
        %825 = vmatprep.subr.mxu0 0.0
        %826 = vmatpush1.msra.mxu0 0.0
        %827 = vmatprep.subr.mxu0 0.0
        %828 = vmatpush1.msra.mxu0 0.0
        %829 = vmatprep.subr.mxu0 0.0
        %830 = vmatpush1.msra.mxu0 0.0
        %831 = vmatprep.subr.mxu0 0.0
        %832 = vmatpush1.msra.mxu0 0.0
        %833 = vmatprep.subr.mxu0 0.0
        %834 = vmatpush1.msra.mxu0 0.0
        %835 = vmatprep.subr.mxu0 0.0
        %836 = vmatpush1.msra.mxu0 0.0
        %837 = vmatprep.mubr.f32.mxu0 0.0
        %838 = vmatmul.mubr.f32.gmra.mrb[0].mxu0 %v771
        %v839 = vpop.f32.mrb[0].mxu0
        %v840 = vadd.f32 %v767, %v839
        %v841 = vpop.f32.mrb[0].mxu0
        %842 = vdwg.mxu0
        %843 = vrot.lane.b32.xlu0 %v352, 112
        %v844 = vpop.permute.xlu0 %843
        %845 = vrot.lane.b32.xlu0 %v352, 80
        %v846 = vpop.permute.xlu0 %845
        %v847 = vsel %vm364, %v844, 0
        %v849 = vsel %vm364, %v846, 0
        %851 = vmatprep.subr.mxu0 0.0
        %852 = vmatpush1.xpose.msra.mxu0 %v849
        %853 = vmatprep.subr.mxu0 0.0
        %854 = vmatpush1.xpose.msra.mxu0 0.0
        %855 = vmatprep.subr.mxu0 0.0
        %856 = vmatpush1.xpose.msra.mxu0 0.0
        %857 = vmatprep.subr.mxu0 0.0
        %858 = vmatpush1.xpose.msra.mxu0 0.0
        %859 = vmatprep.subr.mxu0 0.0
        %860 = vmatpush1.xpose.msra.mxu0 0.0
        %861 = vmatprep.subr.mxu0 0.0
        %862 = vmatpush1.xpose.msra.mxu0 0.0
        %863 = vmatprep.subr.mxu0 0.0
        %864 = vmatpush1.xpose.msra.mxu0 0.0
        %865 = vmatprep.subr.mxu0 0.0
        %866 = vmatpush1.xpose.msra.mxu0 0.0
        %867 = vmatprep.subr.mxu0 0.0
        %868 = vmatpush1.xpose.msra.mxu0 0.0
        %869 = vmatprep.subr.mxu0 0.0
        %870 = vmatpush1.xpose.msra.mxu0 0.0
        %871 = vmatprep.subr.mxu0 0.0
        %872 = vmatpush1.xpose.msra.mxu0 0.0
        %873 = vmatprep.subr.mxu0 0.0
        %874 = vmatpush1.xpose.msra.mxu0 0.0
        %875 = vmatprep.subr.mxu0 0.0
        %876 = vmatpush1.xpose.msra.mxu0 0.0
        %877 = vmatprep.subr.mxu0 0.0
        %878 = vmatpush1.xpose.msra.mxu0 0.0
        %879 = vmatprep.subr.mxu0 0.0
        %880 = vmatpush1.xpose.msra.mxu0 0.0
        %881 = vmatprep.subr.mxu0 0.0
        %882 = vmatpush1.xpose.msra.mxu0 0.0
        %883 = vmatprep.subr.mxu0 0.0
        %884 = vmatpush1.xpose.msra.mxu0 0.0
        %885 = vmatprep.subr.mxu0 0.0
        %886 = vmatpush1.xpose.msra.mxu0 0.0
        %887 = vmatprep.subr.mxu0 0.0
        %888 = vmatpush1.xpose.msra.mxu0 0.0
        %889 = vmatprep.subr.mxu0 0.0
        %890 = vmatpush1.xpose.msra.mxu0 0.0
        %891 = vmatprep.subr.mxu0 0.0
        %892 = vmatpush1.xpose.msra.mxu0 0.0
        %893 = vmatprep.subr.mxu0 0.0
        %894 = vmatpush1.xpose.msra.mxu0 0.0
        %895 = vmatprep.subr.mxu0 0.0
        %896 = vmatpush1.xpose.msra.mxu0 0.0
        %897 = vmatprep.subr.mxu0 0.0
        %898 = vmatpush1.xpose.msra.mxu0 0.0
        %899 = vmatprep.subr.mxu0 0.0
        %900 = vmatpush1.xpose.msra.mxu0 0.0
        %901 = vmatprep.subr.mxu0 0.0
        %902 = vmatpush1.xpose.msra.mxu0 0.0
        %903 = vmatprep.subr.mxu0 0.0
        %904 = vmatpush1.xpose.msra.mxu0 0.0
        %905 = vmatprep.subr.mxu0 0.0
        %906 = vmatpush1.xpose.msra.mxu0 0.0
        %907 = vmatprep.subr.mxu0 0.0
        %908 = vmatpush1.xpose.msra.mxu0 0.0
        %909 = vmatprep.subr.mxu0 0.0
        %910 = vmatpush1.xpose.msra.mxu0 0.0
        %911 = vmatprep.subr.mxu0 0.0
        %912 = vmatpush1.xpose.msra.mxu0 0.0
        %913 = vmatprep.subr.mxu0 0.0
        %914 = vmatpush1.xpose.msra.mxu0 0.0
        %915 = vmatprep.mubr.f32.mxu0 0.0
        %916 = vmatmul.mubr.f32.gmra.mrb[0].mxu0 %v847
        %v917 = vpop.f32.mrb[0].mxu0
        %v918 = vadd.f32 0.0, %v917
        %v919 = vpop.f32.mrb[0].mxu0
        %920 = vdwg.mxu0
        %v921 = vmul.f32 %v918, 0.35355338
        %v922 = vadd.f32 %v921, %v360
        %v923 = vsel %vm364, %v922, -inf
        %924 = vmax.xlane.f32.xlu0 %v923
        %v925 = vpop.xlane.xlu0 %924
        %v926 = vsub.f32 %v922, %v925
        %v927 = vmul.f32 %v926, 1.442695
        %v928 = vpow.pop %v927
        %v929 = vsel %vm364, %v928, 0.0
        %930 = vadd.xlane.f32.xlu0 %v929
        %v931 = vpop.xlane.xlu0 %930
        %v932 = vrcp.pop %v931
        %v933 = vmul.f32 %v928, %v932
        %934 = vrot.lane.b32.xlu0 %v352, 48
        %v935 = vpop.permute.xlu0 %934
        %v938 = vsel %vm364, %v933, 0
        %940 = vmatprep.subr.mxu0 0.0
        %941 = vmatpush1.msra.mxu0 %v935
        %942 = vmatprep.subr.mxu0 0.0
        %943 = vmatpush1.msra.mxu0 0.0
        %944 = vmatprep.subr.mxu0 0.0
        %945 = vmatpush1.msra.mxu0 0.0
        %946 = vmatprep.subr.mxu0 0.0
        %947 = vmatpush1.msra.mxu0 0.0
        %948 = vmatprep.subr.mxu0 0.0
        %949 = vmatpush1.msra.mxu0 0.0
        %950 = vmatprep.subr.mxu0 0.0
        %951 = vmatpush1.msra.mxu0 0.0
        %952 = vmatprep.subr.mxu0 0.0
        %953 = vmatpush1.msra.mxu0 0.0
        %954 = vmatprep.subr.mxu0 0.0
        %955 = vmatpush1.msra.mxu0 0.0
        %956 = vmatprep.subr.mxu0 0.0
        %957 = vmatpush1.msra.mxu0 0.0
        %958 = vmatprep.subr.mxu0 0.0
        %959 = vmatpush1.msra.mxu0 0.0
        %960 = vmatprep.subr.mxu0 0.0
        %961 = vmatpush1.msra.mxu0 0.0
        %962 = vmatprep.subr.mxu0 0.0
        %963 = vmatpush1.msra.mxu0 0.0
        %964 = vmatprep.subr.mxu0 0.0
        %965 = vmatpush1.msra.mxu0 0.0
        %966 = vmatprep.subr.mxu0 0.0
        %967 = vmatpush1.msra.mxu0 0.0
        %968 = vmatprep.subr.mxu0 0.0
        %969 = vmatpush1.msra.mxu0 0.0
        %970 = vmatprep.subr.mxu0 0.0
        %971 = vmatpush1.msra.mxu0 0.0
        %972 = vmatprep.subr.mxu0 0.0
        %973 = vmatpush1.msra.mxu0 0.0
        %974 = vmatprep.subr.mxu0 0.0
        %975 = vmatpush1.msra.mxu0 0.0
        %976 = vmatprep.subr.mxu0 0.0
        %977 = vmatpush1.msra.mxu0 0.0
        %978 = vmatprep.subr.mxu0 0.0
        %979 = vmatpush1.msra.mxu0 0.0
        %980 = vmatprep.subr.mxu0 0.0
        %981 = vmatpush1.msra.mxu0 0.0
        %982 = vmatprep.subr.mxu0 0.0
        %983 = vmatpush1.msra.mxu0 0.0
        %984 = vmatprep.subr.mxu0 0.0
        %985 = vmatpush1.msra.mxu0 0.0
        %986 = vmatprep.subr.mxu0 0.0
        %987 = vmatpush1.msra.mxu0 0.0
        %988 = vmatprep.subr.mxu0 0.0
        %989 = vmatpush1.msra.mxu0 0.0
        %990 = vmatprep.subr.mxu0 0.0
        %991 = vmatpush1.msra.mxu0 0.0
        %992 = vmatprep.subr.mxu0 0.0
        %993 = vmatpush1.msra.mxu0 0.0
        %994 = vmatprep.subr.mxu0 0.0
        %995 = vmatpush1.msra.mxu0 0.0
        %996 = vmatprep.subr.mxu0 0.0
        %997 = vmatpush1.msra.mxu0 0.0
        %998 = vmatprep.subr.mxu0 0.0
        %999 = vmatpush1.msra.mxu0 0.0
        %1000 = vmatprep.subr.mxu0 0.0
        %1001 = vmatpush1.msra.mxu0 0.0
        %1002 = vmatprep.subr.mxu0 0.0
        %1003 = vmatpush1.msra.mxu0 0.0
        %1004 = vmatprep.mubr.f32.mxu0 0.0
        %1005 = vmatmul.mubr.f32.gmra.mrb[0].mxu0 %v938
        %v1006 = vpop.f32.mrb[0].mxu0
        %v1007 = vadd.f32 0.0, %v1006
        %v1008 = vpop.f32.mrb[0].mxu0
        %1009 = vdwg.mxu0
        %v1010 = vld [vmem:[#allocation7 + $0x10] sm:$0xff]
        %v1012 = vsel %vm364, %v1007, 0
        %1014 = vmatprep.subr.mxu0 0.0
        %1015 = vmatpush1.msra.mxu0 %v1010
        %1016 = vmatprep.subr.mxu0 0.0
        %1017 = vmatpush1.msra.mxu0 0.0
        %1018 = vmatprep.subr.mxu0 0.0
        %1019 = vmatpush1.msra.mxu0 0.0
        %1020 = vmatprep.subr.mxu0 0.0
        %1021 = vmatpush1.msra.mxu0 0.0
        %1022 = vmatprep.subr.mxu0 0.0
        %1023 = vmatpush1.msra.mxu0 0.0
        %1024 = vmatprep.subr.mxu0 0.0
        %1025 = vmatpush1.msra.mxu0 0.0
        %1026 = vmatprep.subr.mxu0 0.0
        %1027 = vmatpush1.msra.mxu0 0.0
        %1028 = vmatprep.subr.mxu0 0.0
        %1029 = vmatpush1.msra.mxu0 0.0
        %1030 = vmatprep.subr.mxu0 0.0
        %1031 = vmatpush1.msra.mxu0 0.0
        %1032 = vmatprep.subr.mxu0 0.0
        %1033 = vmatpush1.msra.mxu0 0.0
        %1034 = vmatprep.subr.mxu0 0.0
        %1035 = vmatpush1.msra.mxu0 0.0
        %1036 = vmatprep.subr.mxu0 0.0
        %1037 = vmatpush1.msra.mxu0 0.0
        %1038 = vmatprep.subr.mxu0 0.0
        %1039 = vmatpush1.msra.mxu0 0.0
        %1040 = vmatprep.subr.mxu0 0.0
        %1041 = vmatpush1.msra.mxu0 0.0
        %1042 = vmatprep.subr.mxu0 0.0
        %1043 = vmatpush1.msra.mxu0 0.0
        %1044 = vmatprep.subr.mxu0 0.0
        %1045 = vmatpush1.msra.mxu0 0.0
        %1046 = vmatprep.subr.mxu0 0.0
        %1047 = vmatpush1.msra.mxu0 0.0
        %1048 = vmatprep.subr.mxu0 0.0
        %1049 = vmatpush1.msra.mxu0 0.0
        %1050 = vmatprep.subr.mxu0 0.0
        %1051 = vmatpush1.msra.mxu0 0.0
        %1052 = vmatprep.subr.mxu0 0.0
        %1053 = vmatpush1.msra.mxu0 0.0
        %1054 = vmatprep.subr.mxu0 0.0
        %1055 = vmatpush1.msra.mxu0 0.0
        %1056 = vmatprep.subr.mxu0 0.0
        %1057 = vmatpush1.msra.mxu0 0.0
        %1058 = vmatprep.subr.mxu0 0.0
        %1059 = vmatpush1.msra.mxu0 0.0
        %1060 = vmatprep.subr.mxu0 0.0
        %1061 = vmatpush1.msra.mxu0 0.0
        %1062 = vmatprep.subr.mxu0 0.0
        %1063 = vmatpush1.msra.mxu0 0.0
        %1064 = vmatprep.subr.mxu0 0.0
        %1065 = vmatpush1.msra.mxu0 0.0
        %1066 = vmatprep.subr.mxu0 0.0
        %1067 = vmatpush1.msra.mxu0 0.0
        %1068 = vmatprep.subr.mxu0 0.0
        %1069 = vmatpush1.msra.mxu0 0.0
        %1070 = vmatprep.subr.mxu0 0.0
        %1071 = vmatpush1.msra.mxu0 0.0
        %1072 = vmatprep.subr.mxu0 0.0
        %1073 = vmatpush1.msra.mxu0 0.0
        %1074 = vmatprep.subr.mxu0 0.0
        %1075 = vmatpush1.msra.mxu0 0.0
        %1076 = vmatprep.subr.mxu0 0.0
        %1077 = vmatpush1.msra.mxu0 0.0
        %1078 = vmatprep.mubr.f32.mxu0 0.0
        %1079 = vmatmul.mubr.f32.gmra.mrb[0].mxu0 %v1012
        %v1080 = vpop.f32.mrb[0].mxu0
        %v1081 = vadd.f32 0.0, %v1080
        %v1082 = vpop.f32.mrb[0].mxu0
        %1083 = vdwg.mxu0
        %v1084 = vadd.f32 %v840, %v1081
        %1085 = vrot.lane.b32.xlu0 %v352, 104
        %v1086 = vpop.permute.xlu0 %1085
        %1087 = vrot.lane.b32.xlu0 %v352, 72
        %v1088 = vpop.permute.xlu0 %1087
        %v1089 = vsel %vm364, %v1086, 0
        %v1091 = vsel %vm364, %v1088, 0
        %1093 = vmatprep.subr.mxu0 0.0
        %1094 = vmatpush1.xpose.msra.mxu0 %v1091
        %1095 = vmatprep.subr.mxu0 0.0
        %1096 = vmatpush1.xpose.msra.mxu0 0.0
        %1097 = vmatprep.subr.mxu0 0.0
        %1098 = vmatpush1.xpose.msra.mxu0 0.0
        %1099 = vmatprep.subr.mxu0 0.0
        %1100 = vmatpush1.xpose.msra.mxu0 0.0
        %1101 = vmatprep.subr.mxu0 0.0
        %1102 = vmatpush1.xpose.msra.mxu0 0.0
        %1103 = vmatprep.subr.mxu0 0.0
        %1104 = vmatpush1.xpose.msra.mxu0 0.0
        %1105 = vmatprep.subr.mxu0 0.0
        %1106 = vmatpush1.xpose.msra.mxu0 0.0
        %1107 = vmatprep.subr.mxu0 0.0
        %1108 = vmatpush1.xpose.msra.mxu0 0.0
        %1109 = vmatprep.subr.mxu0 0.0
        %1110 = vmatpush1.xpose.msra.mxu0 0.0
        %1111 = vmatprep.subr.mxu0 0.0
        %1112 = vmatpush1.xpose.msra.mxu0 0.0
        %1113 = vmatprep.subr.mxu0 0.0
        %1114 = vmatpush1.xpose.msra.mxu0 0.0
        %1115 = vmatprep.subr.mxu0 0.0
        %1116 = vmatpush1.xpose.msra.mxu0 0.0
        %1117 = vmatprep.subr.mxu0 0.0
        %1118 = vmatpush1.xpose.msra.mxu0 0.0
        %1119 = vmatprep.subr.mxu0 0.0
        %1120 = vmatpush1.xpose.msra.mxu0 0.0
        %1121 = vmatprep.subr.mxu0 0.0
        %1122 = vmatpush1.xpose.msra.mxu0 0.0
        %1123 = vmatprep.subr.mxu0 0.0
        %1124 = vmatpush1.xpose.msra.mxu0 0.0
        %1125 = vmatprep.subr.mxu0 0.0
        %1126 = vmatpush1.xpose.msra.mxu0 0.0
        %1127 = vmatprep.subr.mxu0 0.0
        %1128 = vmatpush1.xpose.msra.mxu0 0.0
        %1129 = vmatprep.subr.mxu0 0.0
        %1130 = vmatpush1.xpose.msra.mxu0 0.0
        %1131 = vmatprep.subr.mxu0 0.0
        %1132 = vmatpush1.xpose.msra.mxu0 0.0
        %1133 = vmatprep.subr.mxu0 0.0
        %1134 = vmatpush1.xpose.msra.mxu0 0.0
        %1135 = vmatprep.subr.mxu0 0.0
        %1136 = vmatpush1.xpose.msra.mxu0 0.0
        %1137 = vmatprep.subr.mxu0 0.0
        %1138 = vmatpush1.xpose.msra.mxu0 0.0
        %1139 = vmatprep.subr.mxu0 0.0
        %1140 = vmatpush1.xpose.msra.mxu0 0.0
        %1141 = vmatprep.subr.mxu0 0.0
        %1142 = vmatpush1.xpose.msra.mxu0 0.0
        %1143 = vmatprep.subr.mxu0 0.0
        %1144 = vmatpush1.xpose.msra.mxu0 0.0
        %1145 = vmatprep.subr.mxu0 0.0
        %1146 = vmatpush1.xpose.msra.mxu0 0.0
        %1147 = vmatprep.subr.mxu0 0.0
        %1148 = vmatpush1.xpose.msra.mxu0 0.0
        %1149 = vmatprep.subr.mxu0 0.0
        %1150 = vmatpush1.xpose.msra.mxu0 0.0
        %1151 = vmatprep.subr.mxu0 0.0
        %1152 = vmatpush1.xpose.msra.mxu0 0.0
        %1153 = vmatprep.subr.mxu0 0.0
        %1154 = vmatpush1.xpose.msra.mxu0 0.0
        %1155 = vmatprep.subr.mxu0 0.0
        %1156 = vmatpush1.xpose.msra.mxu0 0.0
        %1157 = vmatprep.mubr.f32.mxu0 0.0
        %1158 = vmatmul.mubr.f32.gmra.mrb[0].mxu0 %v1089
        %v1159 = vpop.f32.mrb[0].mxu0
        %v1160 = vadd.f32 0.0, %v1159
        %v1161 = vpop.f32.mrb[0].mxu0
        %1162 = vdwg.mxu0
        %v1163 = vmul.f32 %v1160, 0.35355338
        %v1164 = vadd.f32 %v1163, %v360
        %v1165 = vsel %vm364, %v1164, -inf
        %1166 = vmax.xlane.f32.xlu0 %v1165
        %v1167 = vpop.xlane.xlu0 %1166
        %v1168 = vsub.f32 %v1164, %v1167
        %v1169 = vmul.f32 %v1168, 1.442695
        %v1170 = vpow.pop %v1169
        %v1171 = vsel %vm364, %v1170, 0.0
        %1172 = vadd.xlane.f32.xlu0 %v1171
        %v1173 = vpop.xlane.xlu0 %1172
        %v1174 = vrcp.pop %v1173
        %v1175 = vmul.f32 %v1170, %v1174
        %1176 = vrot.lane.b32.xlu0 %v352, 40
        %v1177 = vpop.permute.xlu0 %1176
        %v1180 = vsel %vm364, %v1175, 0
        %1182 = vmatprep.subr.mxu0 0.0
        %1183 = vmatpush1.msra.mxu0 %v1177
        %1184 = vmatprep.subr.mxu0 0.0
        %1185 = vmatpush1.msra.mxu0 0.0
        %1186 = vmatprep.subr.mxu0 0.0
        %1187 = vmatpush1.msra.mxu0 0.0
        %1188 = vmatprep.subr.mxu0 0.0
        %1189 = vmatpush1.msra.mxu0 0.0
        %1190 = vmatprep.subr.mxu0 0.0
        %1191 = vmatpush1.msra.mxu0 0.0
        %1192 = vmatprep.subr.mxu0 0.0
        %1193 = vmatpush1.msra.mxu0 0.0
        %1194 = vmatprep.subr.mxu0 0.0
        %1195 = vmatpush1.msra.mxu0 0.0
        %1196 = vmatprep.subr.mxu0 0.0
        %1197 = vmatpush1.msra.mxu0 0.0
        %1198 = vmatprep.subr.mxu0 0.0
        %1199 = vmatpush1.msra.mxu0 0.0
        %1200 = vmatprep.subr.mxu0 0.0
        %1201 = vmatpush1.msra.mxu0 0.0
        %1202 = vmatprep.subr.mxu0 0.0
        %1203 = vmatpush1.msra.mxu0 0.0
        %1204 = vmatprep.subr.mxu0 0.0
        %1205 = vmatpush1.msra.mxu0 0.0
        %1206 = vmatprep.subr.mxu0 0.0
        %1207 = vmatpush1.msra.mxu0 0.0
        %1208 = vmatprep.subr.mxu0 0.0
        %1209 = vmatpush1.msra.mxu0 0.0
        %1210 = vmatprep.subr.mxu0 0.0
        %1211 = vmatpush1.msra.mxu0 0.0
        %1212 = vmatprep.subr.mxu0 0.0
        %1213 = vmatpush1.msra.mxu0 0.0
        %1214 = vmatprep.subr.mxu0 0.0
        %1215 = vmatpush1.msra.mxu0 0.0
        %1216 = vmatprep.subr.mxu0 0.0
        %1217 = vmatpush1.msra.mxu0 0.0
        %1218 = vmatprep.subr.mxu0 0.0
        %1219 = vmatpush1.msra.mxu0 0.0
        %1220 = vmatprep.subr.mxu0 0.0
        %1221 = vmatpush1.msra.mxu0 0.0
        %1222 = vmatprep.subr.mxu0 0.0
        %1223 = vmatpush1.msra.mxu0 0.0
        %1224 = vmatprep.subr.mxu0 0.0
        %1225 = vmatpush1.msra.mxu0 0.0
        %1226 = vmatprep.subr.mxu0 0.0
        %1227 = vmatpush1.msra.mxu0 0.0
        %1228 = vmatprep.subr.mxu0 0.0
        %1229 = vmatpush1.msra.mxu0 0.0
        %1230 = vmatprep.subr.mxu0 0.0
        %1231 = vmatpush1.msra.mxu0 0.0
        %1232 = vmatprep.subr.mxu0 0.0
        %1233 = vmatpush1.msra.mxu0 0.0
        %1234 = vmatprep.subr.mxu0 0.0
        %1235 = vmatpush1.msra.mxu0 0.0
        %1236 = vmatprep.subr.mxu0 0.0
        %1237 = vmatpush1.msra.mxu0 0.0
        %1238 = vmatprep.subr.mxu0 0.0
        %1239 = vmatpush1.msra.mxu0 0.0
        %1240 = vmatprep.subr.mxu0 0.0
        %1241 = vmatpush1.msra.mxu0 0.0
        %1242 = vmatprep.subr.mxu0 0.0
        %1243 = vmatpush1.msra.mxu0 0.0
        %1244 = vmatprep.subr.mxu0 0.0
        %1245 = vmatpush1.msra.mxu0 0.0
        %1246 = vmatprep.mubr.f32.mxu0 0.0
        %1247 = vmatmul.mubr.f32.gmra.mrb[0].mxu0 %v1180
        %v1248 = vpop.f32.mrb[0].mxu0
        %v1249 = vadd.f32 0.0, %v1248
        %v1250 = vpop.f32.mrb[0].mxu0
        %1251 = vdwg.mxu0
        %v1252 = vld [vmem:[#allocation7 + $0x18] sm:$0xff]
        %v1254 = vsel %vm364, %v1249, 0
        %1256 = vmatprep.subr.mxu0 0.0
        %1257 = vmatpush1.msra.mxu0 %v1252
        %1258 = vmatprep.subr.mxu0 0.0
        %1259 = vmatpush1.msra.mxu0 0.0
        %1260 = vmatprep.subr.mxu0 0.0
        %1261 = vmatpush1.msra.mxu0 0.0
        %1262 = vmatprep.subr.mxu0 0.0
        %1263 = vmatpush1.msra.mxu0 0.0
        %1264 = vmatprep.subr.mxu0 0.0
        %1265 = vmatpush1.msra.mxu0 0.0
        %1266 = vmatprep.subr.mxu0 0.0
        %1267 = vmatpush1.msra.mxu0 0.0
        %1268 = vmatprep.subr.mxu0 0.0
        %1269 = vmatpush1.msra.mxu0 0.0
        %1270 = vmatprep.subr.mxu0 0.0
        %1271 = vmatpush1.msra.mxu0 0.0
        %1272 = vmatprep.subr.mxu0 0.0
        %1273 = vmatpush1.msra.mxu0 0.0
        %1274 = vmatprep.subr.mxu0 0.0
        %1275 = vmatpush1.msra.mxu0 0.0
        %1276 = vmatprep.subr.mxu0 0.0
        %1277 = vmatpush1.msra.mxu0 0.0
        %1278 = vmatprep.subr.mxu0 0.0
        %1279 = vmatpush1.msra.mxu0 0.0
        %1280 = vmatprep.subr.mxu0 0.0
        %1281 = vmatpush1.msra.mxu0 0.0
        %1282 = vmatprep.subr.mxu0 0.0
        %1283 = vmatpush1.msra.mxu0 0.0
        %1284 = vmatprep.subr.mxu0 0.0
        %1285 = vmatpush1.msra.mxu0 0.0
        %1286 = vmatprep.subr.mxu0 0.0
        %1287 = vmatpush1.msra.mxu0 0.0
        %1288 = vmatprep.subr.mxu0 0.0
        %1289 = vmatpush1.msra.mxu0 0.0
        %1290 = vmatprep.subr.mxu0 0.0
        %1291 = vmatpush1.msra.mxu0 0.0
        %1292 = vmatprep.subr.mxu0 0.0
        %1293 = vmatpush1.msra.mxu0 0.0
        %1294 = vmatprep.subr.mxu0 0.0
        %1295 = vmatpush1.msra.mxu0 0.0
        %1296 = vmatprep.subr.mxu0 0.0
        %1297 = vmatpush1.msra.mxu0 0.0
        %1298 = vmatprep.subr.mxu0 0.0
        %1299 = vmatpush1.msra.mxu0 0.0
        %1300 = vmatprep.subr.mxu0 0.0
        %1301 = vmatpush1.msra.mxu0 0.0
        %1302 = vmatprep.subr.mxu0 0.0
        %1303 = vmatpush1.msra.mxu0 0.0
        %1304 = vmatprep.subr.mxu0 0.0
        %1305 = vmatpush1.msra.mxu0 0.0
        %1306 = vmatprep.subr.mxu0 0.0
        %1307 = vmatpush1.msra.mxu0 0.0
        %1308 = vmatprep.subr.mxu0 0.0
        %1309 = vmatpush1.msra.mxu0 0.0
        %1310 = vmatprep.subr.mxu0 0.0
        %1311 = vmatpush1.msra.mxu0 0.0
        %1312 = vmatprep.subr.mxu0 0.0
        %1313 = vmatpush1.msra.mxu0 0.0
        %1314 = vmatprep.subr.mxu0 0.0
        %1315 = vmatpush1.msra.mxu0 0.0
        %1316 = vmatprep.subr.mxu0 0.0
        %1317 = vmatpush1.msra.mxu0 0.0
        %1318 = vmatprep.subr.mxu0 0.0
        %1319 = vmatpush1.msra.mxu0 0.0
        %1320 = vmatprep.mubr.f32.mxu0 0.0
        %1321 = vmatmul.mubr.f32.gmra.mrb[0].mxu0 %v1254
        %v1322 = vpop.f32.mrb[0].mxu0
        %v1323 = vadd.f32 0.0, %v1322
        %v1324 = vpop.f32.mrb[0].mxu0
        %1325 = vdwg.mxu0
        %v1326 = vadd.f32 %v1084, %v1323
        %v1327 = vld [vmem:[%s4] sm:$0x1]
        %v1329 = vlaneseq
        %v1330 = vshrl.u32 %v1329, 7
        %v1331 = vsub.s32 0, %v1330
        %v1332 = vrot.slane %v1327, %v1331
        %v1334 = vadd.f32 %v1326, %v1332
        %1335 = vst.msk [vmem:[%s268] sm:$0xff] %vm281, %v1334
        %s1336 = sand.u32 %s141, 1
        %s1337 = scalar_lea.sflag [#allocation4], %s1336
        %s1338 = sand.u32 %s141, 1
        %s1339 = smul.addr %s1338, 8
        %s1340 = scalar_lea.vmem [#allocation8], %s1339
        // Predicated region
        $region53: #{tpu_custom_call.1} parent=39 // pred_check
          %p1341 = pneg %p151
        $region54: #{tpu_custom_call.1} parent=39 // pred_check_branch
          %1343 = sbr.rel (%p1341) target = $region56
        $region55: #{tpu_custom_call.1} parent=39 // pred_region
          %s1345 = ssub.s32 128, 128
          %1346 = vsyncadd %s1337, %s1345
          %s1347 = smul.addr %s23, 128
          %s1348 = scalar_lea.hbm %s5, %s1347
          %s1350 = sshll.u32 %s1340, 4
          %s1351 = int_to_ptr.vmem [resolvable:$true] %s1350
          %1353 = dma.vmem_to_hbm [thread:$0]  %s1351, 128, %s1348, %s1337
        $region56: #{tpu_custom_call.1} parent=39 // pred_fallthru
          _
      $region40: #{tpu_custom_call.1} parent=5 // pred_fallthru
        _
      %p1354 = scmp.le.s32.totalorder 2, %s18
      // Predicated region
      $region57: #{tpu_custom_call.1} parent=5 // pred_check
        %p1355 = pneg %p1354
      $region58: #{tpu_custom_call.1} parent=5 // pred_check_branch
        %1357 = sbr.rel (%p1355) target = $region60
      $region59: #{tpu_custom_call.1} parent=5 // pred_region
        %s1358 = ssub.s32 %s18, 2
        // Predicated region
        $region61: #{tpu_custom_call.1} parent=59 // pred_check
          %p1359 = pneg %p157
        $region62: #{tpu_custom_call.1} parent=59 // pred_check_branch
          %1361 = sbr.rel (%p1359) target = $region64
        $region63: #{tpu_custom_call.1} parent=59 // pred_region
          %s1362 = sand.u32 %s142, 1
          %s1363 = scalar_lea.sflag [#allocation4], %s1362
          %s1364 = sand.u32 %s142, 1
          %s1365 = smul.addr %s1364, 8
          %s1366 = scalar_lea.vmem [#allocation8], %s1365
          %1367 = dma.done %s1363, 128
        $region64: #{tpu_custom_call.1} parent=59 // pred_fallthru
          _
      $region60: #{tpu_custom_call.1} parent=5 // pred_fallthru
        _
    $region6: #{tpu_custom_call.1} parent=1 // loop_footer
      %s22 = sadd.s32 1, %s18
    $region7: #{tpu_custom_call.1} parent=1 // loop_footer_branch
      %17 = sbr.rel target = $region3
    $region8: #{tpu_custom_call.1} parent=1 // loop_exit
      _
    %1368 = vsyncpa [#allocation3], 1
    %s1369 = scalar_lea.sflag [#allocation3], 1
    %1370 = vsyncpa %s1369, 1
    %1371 = vsyncpa [#allocation6], 1
    %1372 = vsyncpa [#allocation4], 1
    %s1373 = scalar_lea.sflag [#allocation4], 1
    %1374 = vsyncpa %s1373, 1

</llo_original>
